<compile_context>
chip_gen: v7x
topology: tpu7x:2x2x1
jax: 0.10.0
libtpu: 0.0.40
codegen_flags: <defaults>
</compile_context>

<pallas_src>
import jax
import jax.numpy as jnp
from jax.experimental import pallas as pl
from jax.experimental.pallas import tpu as pltpu


H1, H2 = 512, 256            # hidden widths from the PyTorch module
LEAKY_SLOPE = 0.2

_X_TILE_BUDGET = 24 * 1024 * 1024   # VMEM budget for the pipelined x tiles (v7x-safe)


def _discriminator_kernel(x_ref, w1_ref, b1_ref, w2_ref, b2_ref,
                          w3_ref, b3_ref, out_ref):
    # x arrives in f32 straight from HBM; cast to bf16 in-register right before
    # the MXU (no separate XLA cast pass over x).
    x = x_ref[...].astype(w1_ref.dtype)                              # (TM, D) bf16

    # Layer 1: Linear(D, 512) + LeakyReLU(0.2)   (bf16 MXU, f32 accumulate)
    h1 = jnp.dot(x, w1_ref[...], preferred_element_type=jnp.float32)
    h1 = h1 + b1_ref[...]
    h1 = jnp.maximum(h1, LEAKY_SLOPE * h1)

    # Layer 2: Linear(512, 256) + LeakyReLU(0.2)
    h2 = jnp.dot(h1.astype(w2_ref.dtype), w2_ref[...],
                 preferred_element_type=jnp.float32)
    h2 = h2 + b2_ref[...]
    h2 = jnp.maximum(h2, LEAKY_SLOPE * h2)

    # Layer 3: Linear(256, 1).  N=1 would waste a full MXU pass; do it as a VPU
    # multiply + lane reduction against the f32 (1, 256) weight row instead.
    out = jnp.sum(h2 * w3_ref[...], axis=-1, keepdims=True)          # (TM, 1)
    out_ref[...] = out + b3_ref[0, 0]


def _choose_tiling(b, d_in):
    """Pick (TM, num_tiles, pad_rows, n_x_buffers)."""
    if b <= 256:
        # Single tile; round to the 8-row sublane granule (tiny pad, if any).
        tm = ((b + 7) // 8) * 8
    else:
        # >= 2 grid steps for b > 256 (keeps both v7x TensorCores busy) and a
        # bigger tile for large b to amortize per-step overhead.
        tm = 512 if b >= 1024 else 256
        # Cap the double-buffered f32 x-tile footprint for v7x's 64 MiB VMEM.
        while tm > 128 and 2 * tm * d_in * 4 > _X_TILE_BUDGET:
            tm //= 2
    num_tiles = -(-b // tm)
    pad_rows = (tm - b) if (b <= 256 and tm > b) else 0   # large b: never pad
    n_buf = 3 if (num_tiles >= 3 and 3 * tm * d_in * 4 <= _X_TILE_BUDGET) else 2
    return tm, num_tiles, pad_rows, n_buf


def discriminator_forward(img, params, *, compute_dtype=jnp.bfloat16):
    """img: (B, C, H, W) float32.  Returns validity (B, 1) float32."""
    b = img.shape[0]
    x = img.reshape(b, -1)                          # matches torch .view(B, -1); stays f32
    d_in = x.shape[1]

    w1, b1, w2, b2, w3, b3 = params

    # Low-precision MXU weights (cast once; f32 accumulation inside the kernel).
    w1_lp = w1.astype(compute_dtype)
    w2_lp = w2.astype(compute_dtype)
    w3_row = w3.reshape(1, H2).astype(jnp.float32)   # final layer stays f32 on the VPU
    b1_f = b1.reshape(1, H1).astype(jnp.float32)
    b2_f = b2.reshape(1, H2).astype(jnp.float32)
    b3_sc = b3.reshape(1, 1).astype(jnp.float32)     # scalar, lives in SMEM

    tm, num_tiles, pad_rows, n_buf = _choose_tiling(b, d_in)
    if pad_rows:                                     # tiny batches only; negligible copy
        x = jnp.pad(x, ((0, pad_rows), (0, 0)))
    grid = (num_tiles,)
    out_rows = num_tiles * tm                        # ragged last x block reads past row b;
                                                     # rows >= b are independent & sliced off.

    if n_buf != 2:
        x_spec = pl.BlockSpec((tm, d_in), lambda i: (i, 0),
                              pipeline_mode=pl.Buffered(n_buf))
    else:
        x_spec = pl.BlockSpec((tm, d_in), lambda i: (i, 0))

    # VMEM estimate: pipelined x tiles + (double-buffered) resident weights + live acts.
    vmem_est = (n_buf * tm * d_in * 4
                + 2 * 2 * (d_in * H1 + H1 * H2)
                + 4 * (H1 + 2 * H2 + 1)
                + tm * (4 * (H1 + H2 + 1) + 2 * (H1 + H2))
                + 2 * tm * 4)
    vmem_limit = max(32 * 1024 * 1024, min(vmem_est + (8 << 20), 60 * 1024 * 1024))

    flops = 2 * b * (d_in * H1 + H1 * H2 + H2)
    bytes_accessed = (x.size * 4
                      + (w1_lp.size + w2_lp.size) * 2
                      + (w3_row.size + b1_f.size + b2_f.size + 1) * 4
                      + out_rows * 4)

    out = pl.pallas_call(
        _discriminator_kernel,
        out_shape=jax.ShapeDtypeStruct((out_rows, 1), jnp.float32),
        grid=grid,
        in_specs=[
            x_spec,                                              # x tile (pipelined, f32)
            pl.BlockSpec((d_in, H1), lambda i: (0, 0)),          # w1 (VMEM resident)
            pl.BlockSpec((1, H1), lambda i: (0, 0)),             # b1
            pl.BlockSpec((H1, H2), lambda i: (0, 0)),            # w2
            pl.BlockSpec((1, H2), lambda i: (0, 0)),             # b2
            pl.BlockSpec((1, H2), lambda i: (0, 0)),             # w3 as an f32 row
            pl.BlockSpec(memory_space=pltpu.MemorySpace.SMEM),   # b3 scalar
        ],
        out_specs=pl.BlockSpec((tm, 1), lambda i: (i, 0)),
        compiler_params=pltpu.CompilerParams(
            dimension_semantics=("parallel",),
            vmem_limit_bytes=vmem_limit),
        cost_estimate=pl.CostEstimate(
            flops=flops, transcendentals=0, bytes_accessed=bytes_accessed),
    )(x, w1_lp, b1_f, w2_lp, b2_f, w3_row, b3_sc)

    return out[:b]


def init_params(key, in_dim):
    """Deterministic PyTorch-style init.

    nn.Linear(in, out) stores weight (out, in); we store the transpose (in, out)
    so the kernel can do x @ W directly — numerically identical to x @ W.T.
    Init mimics torch's default U(-1/sqrt(fan_in), 1/sqrt(fan_in)).
    """
    dims = [(in_dim, H1), (H1, H2), (H2, 1)]
    params = []
    for i, (fan_in, fan_out) in enumerate(dims):
        kw, kb = jax.random.split(jax.random.fold_in(key, i))
        bound = 1.0 / (fan_in ** 0.5)
        w = jax.random.uniform(kw, (fan_in, fan_out), jnp.float32, -bound, bound)
        bias = jax.random.uniform(kb, (1, fan_out), jnp.float32, -bound, bound)
        params += [w, bias]
    return tuple(params)


def _reference(x_flat, params, compute_dtype=jnp.bfloat16):
    """Pure-JAX reference with the same (bf16-in, f32-acc, f32 w3) math."""
    w1, b1, w2, b2, w3, b3 = params
    f32 = jnp.float32
    hp = jax.lax.Precision.HIGHEST

    def lp(a):
        return a.astype(compute_dtype).astype(f32)

    h1 = jnp.dot(lp(x_flat), lp(w1), precision=hp) + b1
    h1 = jnp.maximum(h1, 0.2 * h1)
    h2 = jnp.dot(lp(h1), lp(w2), precision=hp) + b2
    h2 = jnp.maximum(h2, 0.2 * h2)
    out = jnp.sum(h2 * w3.reshape(1, -1), axis=-1, keepdims=True)
    return out + b3.reshape(1, 1)


if __name__ == "__main__":
    # Small shapes consistent with the module: img_shape = (channels, img_size, img_size)
    B, C, H, W = 2, 4, 16, 16
    in_dim = C * H * W  # 1024

    key = jax.random.PRNGKey(0)
    k_img, k_params = jax.random.split(key)
    img = jax.random.normal(k_img, (B, C, H, W), dtype=jnp.float32)
    params = init_params(k_params, in_dim)

    validity = discriminator_forward(img, params)
    jax.block_until_ready(validity)

    assert validity.shape == (B, 1) and validity.dtype == jnp.float32

    # Sanity check against a pure-JAX reference of the same reduced-precision math.
    ref = _reference(img.reshape(B, -1), params)
    assert jnp.allclose(validity, ref, atol=1e-2, rtol=1e-2), (
        f"max abs err {jnp.max(jnp.abs(validity - ref))}")

    print("KERNEL_OK")
</pallas_src>

<mosaic_0001>
module attributes {stable_mosaic.version = 11 : i64} {
  func.func @_discriminator_kernel(%arg0: i32, %arg1: memref<8x1024xf32, #tpu.memory_space<vmem>>, %arg2: memref<1024x512xbf16, #tpu.memory_space<vmem>>, %arg3: memref<1x512xf32, #tpu.memory_space<vmem>>, %arg4: memref<512x256xbf16, #tpu.memory_space<vmem>>, %arg5: memref<1x256xf32, #tpu.memory_space<vmem>>, %arg6: memref<1x256xf32, #tpu.memory_space<vmem>>, %arg7: memref<1x1xf32, #tpu.memory_space<smem>>, %arg8: memref<8x1xf32, #tpu.memory_space<vmem>>) attributes {dimension_semantics = [#tpu.dimension_semantics<parallel>], iteration_bounds = array<i64: 1>, scalar_prefetch = 0 : i64, scratch_operands = 0 : i64, tpu.core_type = #tpu.core_type<tc>, window_params = [{transform_indices = @transform_0, window_bounds = array<i64: 8, 1024>}, {pipeline_mode = #tpu.pipeline_mode<synchronous>, transform_indices = @transform_1, window_bounds = array<i64: 1024, 512>}, {pipeline_mode = #tpu.pipeline_mode<synchronous>, transform_indices = @transform_2, window_bounds = array<i64: 1, 512>}, {pipeline_mode = #tpu.pipeline_mode<synchronous>, transform_indices = @transform_3, window_bounds = array<i64: 512, 256>}, {pipeline_mode = #tpu.pipeline_mode<synchronous>, transform_indices = @transform_4, window_bounds = array<i64: 1, 256>}, {pipeline_mode = #tpu.pipeline_mode<synchronous>, transform_indices = @transform_5, window_bounds = array<i64: 1, 256>}, {transform_indices = @transform_6, window_bounds = array<i64: 1, 1>}, {transform_indices = @transform_7, window_bounds = array<i64: 8, 1>}]} {
    %c0 = arith.constant 0 : index
    %c0_0 = arith.constant 0 : index
    %0 = vector.load %arg1[%c0, %c0_0] : memref<8x1024xf32, #tpu.memory_space<vmem>>, vector<8x1024xf32>
    %1 = arith.truncf %0 : vector<8x1024xf32> to vector<8x1024xbf16>
    %c0_1 = arith.constant 0 : index
    %c0_2 = arith.constant 0 : index
    %2 = vector.load %arg2[%c0_1, %c0_2] : memref<1024x512xbf16, #tpu.memory_space<vmem>>, vector<1024x512xbf16>
    %cst = arith.constant dense<0.000000e+00> : vector<8x512xf32>
    %3 = tpu.matmul %1, %2, %cst {dimension_numbers = #tpu.dot_dimension_numbers<[1], [0], [0], [1], [0, 0, 1, 1], [], []>} : vector<8x1024xbf16>, vector<1024x512xbf16>, vector<8x512xf32> -> vector<8x512xf32>
    %c0_3 = arith.constant 0 : index
    %c0_4 = arith.constant 0 : index
    %4 = vector.load %arg3[%c0_3, %c0_4] : memref<1x512xf32, #tpu.memory_space<vmem>>, vector<1x512xf32>
    %5 = vector.broadcast %4 : vector<1x512xf32> to vector<8x512xf32>
    %6 = arith.addf %3, %5 : vector<8x512xf32>
    %cst_5 = arith.constant 2.000000e-01 : f32
    %7 = vector.broadcast %cst_5 : f32 to vector<8x512xf32>
    %8 = arith.mulf %7, %6 : vector<8x512xf32>
    %9 = arith.maximumf %6, %8 : vector<8x512xf32>
    %10 = arith.truncf %9 : vector<8x512xf32> to vector<8x512xbf16>
    %c0_6 = arith.constant 0 : index
    %c0_7 = arith.constant 0 : index
    %11 = vector.load %arg4[%c0_6, %c0_7] : memref<512x256xbf16, #tpu.memory_space<vmem>>, vector<512x256xbf16>
    %cst_8 = arith.constant dense<0.000000e+00> : vector<8x256xf32>
    %12 = tpu.matmul %10, %11, %cst_8 {dimension_numbers = #tpu.dot_dimension_numbers<[1], [0], [0], [1], [0, 0, 1, 1], [], []>} : vector<8x512xbf16>, vector<512x256xbf16>, vector<8x256xf32> -> vector<8x256xf32>
    %c0_9 = arith.constant 0 : index
    %c0_10 = arith.constant 0 : index
    %13 = vector.load %arg5[%c0_9, %c0_10] : memref<1x256xf32, #tpu.memory_space<vmem>>, vector<1x256xf32>
    %14 = vector.broadcast %13 : vector<1x256xf32> to vector<8x256xf32>
    %15 = arith.addf %12, %14 : vector<8x256xf32>
    %cst_11 = arith.constant 2.000000e-01 : f32
    %16 = vector.broadcast %cst_11 : f32 to vector<8x256xf32>
    %17 = arith.mulf %16, %15 : vector<8x256xf32>
    %18 = arith.maximumf %15, %17 : vector<8x256xf32>
    %c0_12 = arith.constant 0 : index
    %c0_13 = arith.constant 0 : index
    %19 = vector.load %arg6[%c0_12, %c0_13] : memref<1x256xf32, #tpu.memory_space<vmem>>, vector<1x256xf32>
    %20 = vector.broadcast %19 : vector<1x256xf32> to vector<8x256xf32>
    %21 = arith.mulf %18, %20 : vector<8x256xf32>
    %cst_14 = arith.constant dense<0.000000e+00> : vector<8xf32>
    %22 = vector.multi_reduction <add>, %21, %cst_14 [1] : vector<8x256xf32> to vector<8xf32>
    %23 = vector.shape_cast %22 : vector<8xf32> to vector<8x1xf32>
    %c0_15 = arith.constant 0 : index
    %c0_16 = arith.constant 0 : index
    %24 = memref.load %arg7[%c0_15, %c0_16] : memref<1x1xf32, #tpu.memory_space<smem>>
    %25 = vector.broadcast %24 : f32 to vector<8x1xf32>
    %26 = arith.addf %23, %25 : vector<8x1xf32>
    %c0_17 = arith.constant 0 : index
    %c0_18 = arith.constant 0 : index
    %27 = vector.load %arg8[%c0_17, %c0_18] : memref<8x1xf32, #tpu.memory_space<vmem>>, vector<8x1xf32>
    tpu.vector_store %arg8[%c0_17, %c0_18], %26 {strides = array<i32>} : memref<8x1xf32, #tpu.memory_space<vmem>>, vector<8x1xf32>,
    return
  }
  func.func @transform_0(%arg0: i32) -> (i32, i32) {
    %c0_i32 = arith.constant 0 : i32
    %c0_i32_0 = arith.constant 0 : i32
    return %arg0, %c0_i32 : i32, i32
  }
  func.func @transform_1(%arg0: i32) -> (i32, i32) {
    %c0_i32 = arith.constant 0 : i32
    %c0_i32_0 = arith.constant 0 : i32
    %c0_i32_1 = arith.constant 0 : i32
    return %c0_i32, %c0_i32_0 : i32, i32
  }
  func.func @transform_2(%arg0: i32) -> (i32, i32) {
    %c0_i32 = arith.constant 0 : i32
    %c0_i32_0 = arith.constant 0 : i32
    %c0_i32_1 = arith.constant 0 : i32
    return %c0_i32, %c0_i32_0 : i32, i32
  }
  func.func @transform_3(%arg0: i32) -> (i32, i32) {
    %c0_i32 = arith.constant 0 : i32
    %c0_i32_0 = arith.constant 0 : i32
    %c0_i32_1 = arith.constant 0 : i32
    return %c0_i32, %c0_i32_0 : i32, i32
  }
  func.func @transform_4(%arg0: i32) -> (i32, i32) {
    %c0_i32 = arith.constant 0 : i32
    %c0_i32_0 = arith.constant 0 : i32
    %c0_i32_1 = arith.constant 0 : i32
    return %c0_i32, %c0_i32_0 : i32, i32
  }
  func.func @transform_5(%arg0: i32) -> (i32, i32) {
    %c0_i32 = arith.constant 0 : i32
    %c0_i32_0 = arith.constant 0 : i32
    %c0_i32_1 = arith.constant 0 : i32
    return %c0_i32, %c0_i32_0 : i32, i32
  }
  func.func @transform_6(%arg0: i32) -> (i32, i32) {
    %c0_i32 = arith.constant 0 : i32
    %c0_i32_0 = arith.constant 0 : i32
    %c0_i32_1 = arith.constant 0 : i32
    return %c0_i32, %c0_i32_0 : i32, i32
  }
  func.func @transform_7(%arg0: i32) -> (i32, i32) {
    %c0_i32 = arith.constant 0 : i32
    %c0_i32_0 = arith.constant 0 : i32
    return %arg0, %c0_i32 : i32, i32
  }
}

</mosaic_0001>

<llo_original>
// kernel: tpu_custom_call.1
$region0: #{tpu_custom_call.1}
  #allocation0 [shape = 'u32[]', space=smem, size = 0x4, offset = 0x4, fixed_abs, tag = 'smem constant byte address 0x4 - core index']
  #allocation1 [shape = 'u32[144,128]{1,0:T(1,128)}', space=vmem, size = 0x12000, scoped, tag = 'internal scratch']
  #allocation2 [shape = 'f32[1,1]{1,0:T(1,128)S(6)}', space=smem, size = 0x200, scoped, tag = 'scoped memory for tpu_custom_call.1']
  %s0 = inlined_call_operand.hbm [shape: f32[8,1024], index: 0, kind: input, shape index: {}]
  %s1 = inlined_call_operand.hbm [shape: bf16[1024,512], index: 1, kind: input, shape index: {}]
  %s2 = inlined_call_operand.vmem [shape: f32[1,512], index: 2, kind: input, shape index: {}]
  %s3 = inlined_call_operand.hbm [shape: bf16[512,256], index: 3, kind: input, shape index: {}]
  %s4 = inlined_call_operand.vmem [shape: f32[1,256], index: 4, kind: input, shape index: {}]
  %s5 = inlined_call_operand.vmem [shape: f32[1,256], index: 5, kind: input, shape index: {}]
  %s6 = inlined_call_operand.<no memory space> [shape: f32[1,1], index: 6, kind: input, shape index: {}]
  %s7 = inlined_call_operand.vmem [shape: f32[8,1], index: 7, kind: output, shape index: {}]
  %s8 = sld [smem:[#allocation0]]
  $region50: #{tpu_custom_call.1} parent=0
    _
  %s10 = ssub.s32 1, %s8
  %s11 = scalar_select 0, %s10, %s8
  %12 = sst [smem:[#allocation2]] %s6
  $region1: #{tpu_custom_call.1} parent=0
    #allocation3 [shape = 'u8[32768]{0}', space=vmem, size = 0x8000, scoped, tag = 'input window, operand 0, single buffered']
    #allocation4 [shape = 's32[1]{0}', space=sflag, size = 0x4, scoped, tag = 'scoped memory for tpu_custom_call.1']
    #allocation5 [shape = 'u8[1048576]{0}', space=vmem, size = 0x100000, scoped, tag = 'input window, operand 1, single buffered']
    #allocation6 [shape = 's32[1]{0}', space=sflag, size = 0x4, scoped, tag = 'scoped memory for tpu_custom_call.1']
    #allocation7 [shape = 'u8[262144]{0}', space=vmem, size = 0x40000, scoped, tag = 'input window, operand 3, single buffered']
    %13 = vsyncpa [#allocation4], 0
    %14 = vsyncpa [#allocation6], 0
    // Predicated region
    $region2: #{tpu_custom_call.1} parent=1 // pred_check
      _
    $region3: #{tpu_custom_call.1} parent=1 // pred_check_branch
      %16 = sbr.rel (0) target = $region5
    $region4: #{tpu_custom_call.1} parent=1 // pred_region
      %s18 = ssub.s32 1024, 1024
      %19 = vsyncadd [#allocation4], %s18
      %s21 = sshll.u32 [#allocation3], 4
      %s22 = int_to_ptr.vmem [resolvable:$true] %s21
      %24 = dma.hbm_to_vmem [thread:$0]  %s0, 1024, %s22, [#allocation4]
    $region5: #{tpu_custom_call.1} parent=1 // pred_fallthru
      _
    // Predicated region
    $region6: #{tpu_custom_call.1} parent=1 // pred_check
      _
    $region7: #{tpu_custom_call.1} parent=1 // pred_check_branch
      %26 = sbr.rel (0) target = $region9
    $region8: #{tpu_custom_call.1} parent=1 // pred_region
      %s28 = ssub.s32 32768, 32768
      %29 = vsyncadd [#allocation6], %s28
      %s30 = sshll.u32 [#allocation5], 4
      %s31 = int_to_ptr.vmem [resolvable:$true] %s30
      %36 = dma.hbm_to_vmem [thread:$0]  %s1, 32768, %s31, [#allocation6], 256, 256, 16
    $region9: #{tpu_custom_call.1} parent=1 // pred_fallthru
      _
    // Predicated region
    $region10: #{tpu_custom_call.1} parent=1 // pred_check
      _
    $region11: #{tpu_custom_call.1} parent=1 // pred_check_branch
      %38 = sbr.rel (0) target = $region13
    $region12: #{tpu_custom_call.1} parent=1 // pred_region
      _
    $region13: #{tpu_custom_call.1} parent=1 // pred_fallthru
      _
    // Predicated region
    $region14: #{tpu_custom_call.1} parent=1 // pred_check
      _
    $region15: #{tpu_custom_call.1} parent=1 // pred_check_branch
      %40 = sbr.rel (0) target = $region17
    $region16: #{tpu_custom_call.1} parent=1 // pred_region
      %s42 = ssub.s32 8192, 8192
      %43 = vsyncadd [#allocation6], %s42
      %s44 = sshll.u32 [#allocation7], 4
      %s45 = int_to_ptr.vmem [resolvable:$true] %s44
      %50 = dma.hbm_to_vmem [thread:$0]  %s3, 8192, %s45, [#allocation6], 128, 128, 8
    $region17: #{tpu_custom_call.1} parent=1 // pred_fallthru
      _
    // Predicated region
    $region18: #{tpu_custom_call.1} parent=1 // pred_check
      _
    $region19: #{tpu_custom_call.1} parent=1 // pred_check_branch
      %52 = sbr.rel (0) target = $region21
    $region20: #{tpu_custom_call.1} parent=1 // pred_region
      _
    $region21: #{tpu_custom_call.1} parent=1 // pred_fallthru
      _
    // Predicated region
    $region22: #{tpu_custom_call.1} parent=1 // pred_check
      _
    $region23: #{tpu_custom_call.1} parent=1 // pred_check_branch
      %54 = sbr.rel (0) target = $region25
    $region24: #{tpu_custom_call.1} parent=1 // pred_region
      _
    $region25: #{tpu_custom_call.1} parent=1 // pred_fallthru
      _
    // Predicated region
    $region26: #{tpu_custom_call.1} parent=1 // pred_check
      _
    $region27: #{tpu_custom_call.1} parent=1 // pred_check_branch
      %56 = sbr.rel (0) target = $region29
    $region28: #{tpu_custom_call.1} parent=1 // pred_region
      _
    $region29: #{tpu_custom_call.1} parent=1 // pred_fallthru
      _
    // Predicated region
    $region30: #{tpu_custom_call.1} parent=1 // pred_check
      _
    $region31: #{tpu_custom_call.1} parent=1 // pred_check_branch
      %58 = sbr.rel (0) target = $region33
    $region32: #{tpu_custom_call.1} parent=1 // pred_region
      %59 = dma.done [#allocation4], 1024
    $region33: #{tpu_custom_call.1} parent=1 // pred_fallthru
      _
    // Predicated region
    $region34: #{tpu_custom_call.1} parent=1 // pred_check
      _
    $region35: #{tpu_custom_call.1} parent=1 // pred_check_branch
      %61 = sbr.rel (0) target = $region37
    $region36: #{tpu_custom_call.1} parent=1 // pred_region
      %62 = dma.done [#allocation6], 32768
    $region37: #{tpu_custom_call.1} parent=1 // pred_fallthru
      _
    // Predicated region
    $region38: #{tpu_custom_call.1} parent=1 // pred_check
      _
    $region39: #{tpu_custom_call.1} parent=1 // pred_check_branch
      %64 = sbr.rel (0) target = $region41
    $region40: #{tpu_custom_call.1} parent=1 // pred_region
      %65 = dma.done [#allocation6], 8192
    $region41: #{tpu_custom_call.1} parent=1 // pred_fallthru
      _
    %v66 = vld [vmem:[#allocation3] sm:$0xff]
    %v67 = vld [vmem:[#allocation3 + $0x8] sm:$0xff]
    %v68 = vld [vmem:[#allocation3 + $0x10] sm:$0xff]
    %v69 = vld [vmem:[#allocation3 + $0x18] sm:$0xff]
    %v70 = vld [vmem:[#allocation3 + $0x20] sm:$0xff]
    %v71 = vld [vmem:[#allocation3 + $0x28] sm:$0xff]
    %v72 = vld [vmem:[#allocation3 + $0x30] sm:$0xff]
    %v73 = vld [vmem:[#allocation3 + $0x38] sm:$0xff]
    %v74 = vpack.c.bf16 %v66, %v66
    %v75 = vpack.c.bf16 %v67, %v67
    %v76 = vpack.c.bf16 %v68, %v68
    %v77 = vpack.c.bf16 %v69, %v69
    %v78 = vpack.c.bf16 %v70, %v70
    %v79 = vpack.c.bf16 %v71, %v71
    %v80 = vpack.c.bf16 %v72, %v72
    %v81 = vpack.c.bf16 %v73, %v73
    %v82 = vld [vmem:[#allocation5] sm:$0xff]
    %v83 = vld [vmem:[#allocation5 + $0x8] sm:$0xff]
    %v84 = vld [vmem:[#allocation5 + $0x10] sm:$0xff]
    %v85 = vld [vmem:[#allocation5 + $0x18] sm:$0xff]
    %v86 = vld [vmem:[#allocation5 + $0x20] sm:$0xff]
    %v87 = vld [vmem:[#allocation5 + $0x28] sm:$0xff]
    %v88 = vld [vmem:[#allocation5 + $0x30] sm:$0xff]
    %v89 = vld [vmem:[#allocation5 + $0x38] sm:$0xff]
    %v90 = vld [vmem:[#allocation5 + $0x40] sm:$0xff]
    %v91 = vld [vmem:[#allocation5 + $0x48] sm:$0xff]
    %v92 = vld [vmem:[#allocation5 + $0x50] sm:$0xff]
    %v93 = vld [vmem:[#allocation5 + $0x58] sm:$0xff]
    %v94 = vld [vmem:[#allocation5 + $0x60] sm:$0xff]
    %v95 = vld [vmem:[#allocation5 + $0x68] sm:$0xff]
    %v96 = vld [vmem:[#allocation5 + $0x70] sm:$0xff]
    %v97 = vld [vmem:[#allocation5 + $0x78] sm:$0xff]
    %v98 = vld [vmem:[#allocation5 + $0x80] sm:$0xff]
    %v99 = vld [vmem:[#allocation5 + $0x88] sm:$0xff]
    %v100 = vld [vmem:[#allocation5 + $0x90] sm:$0xff]
    %v101 = vld [vmem:[#allocation5 + $0x98] sm:$0xff]
    %v102 = vld [vmem:[#allocation5 + $0xa0] sm:$0xff]
    %v103 = vld [vmem:[#allocation5 + $0xa8] sm:$0xff]
    %v104 = vld [vmem:[#allocation5 + $0xb0] sm:$0xff]
    %v105 = vld [vmem:[#allocation5 + $0xb8] sm:$0xff]
    %v106 = vld [vmem:[#allocation5 + $0xc0] sm:$0xff]
    %v107 = vld [vmem:[#allocation5 + $0xc8] sm:$0xff]
    %v108 = vld [vmem:[#allocation5 + $0xd0] sm:$0xff]
    %v109 = vld [vmem:[#allocation5 + $0xd8] sm:$0xff]
    %v110 = vld [vmem:[#allocation5 + $0xe0] sm:$0xff]
    %v111 = vld [vmem:[#allocation5 + $0xe8] sm:$0xff]
    %v112 = vld [vmem:[#allocation5 + $0xf0] sm:$0xff]
    %v113 = vld [vmem:[#allocation5 + $0xf8] sm:$0xff]
    %v114 = vld [vmem:[#allocation5 + $0x100] sm:$0xff]
    %v115 = vld [vmem:[#allocation5 + $0x108] sm:$0xff]
    %v116 = vld [vmem:[#allocation5 + $0x110] sm:$0xff]
    %v117 = vld [vmem:[#allocation5 + $0x118] sm:$0xff]
    %v118 = vld [vmem:[#allocation5 + $0x120] sm:$0xff]
    %v119 = vld [vmem:[#allocation5 + $0x128] sm:$0xff]
    %v120 = vld [vmem:[#allocation5 + $0x130] sm:$0xff]
    %v121 = vld [vmem:[#allocation5 + $0x138] sm:$0xff]
    %v122 = vld [vmem:[#allocation5 + $0x140] sm:$0xff]
    %v123 = vld [vmem:[#allocation5 + $0x148] sm:$0xff]
    %v124 = vld [vmem:[#allocation5 + $0x150] sm:$0xff]
    %v125 = vld [vmem:[#allocation5 + $0x158] sm:$0xff]
    %v126 = vld [vmem:[#allocation5 + $0x160] sm:$0xff]
    %v127 = vld [vmem:[#allocation5 + $0x168] sm:$0xff]
    %v128 = vld [vmem:[#allocation5 + $0x170] sm:$0xff]
    %v129 = vld [vmem:[#allocation5 + $0x178] sm:$0xff]
    %v130 = vld [vmem:[#allocation5 + $0x180] sm:$0xff]
    %v131 = vld [vmem:[#allocation5 + $0x188] sm:$0xff]
    %v132 = vld [vmem:[#allocation5 + $0x190] sm:$0xff]
    %v133 = vld [vmem:[#allocation5 + $0x198] sm:$0xff]
    %v134 = vld [vmem:[#allocation5 + $0x1a0] sm:$0xff]
    %v135 = vld [vmem:[#allocation5 + $0x1a8] sm:$0xff]
    %v136 = vld [vmem:[#allocation5 + $0x1b0] sm:$0xff]
    %v137 = vld [vmem:[#allocation5 + $0x1b8] sm:$0xff]
    %v138 = vld [vmem:[#allocation5 + $0x1c0] sm:$0xff]
    %v139 = vld [vmem:[#allocation5 + $0x1c8] sm:$0xff]
    %v140 = vld [vmem:[#allocation5 + $0x1d0] sm:$0xff]
    %v141 = vld [vmem:[#allocation5 + $0x1d8] sm:$0xff]
    %v142 = vld [vmem:[#allocation5 + $0x1e0] sm:$0xff]
    %v143 = vld [vmem:[#allocation5 + $0x1e8] sm:$0xff]
    %v144 = vld [vmem:[#allocation5 + $0x1f0] sm:$0xff]
    %v145 = vld [vmem:[#allocation5 + $0x1f8] sm:$0xff]
    %v146 = vld [vmem:[#allocation5 + $0x200] sm:$0xff]
    %v147 = vld [vmem:[#allocation5 + $0x208] sm:$0xff]
    %v148 = vld [vmem:[#allocation5 + $0x210] sm:$0xff]
    %v149 = vld [vmem:[#allocation5 + $0x218] sm:$0xff]
    %v150 = vld [vmem:[#allocation5 + $0x220] sm:$0xff]
    %v151 = vld [vmem:[#allocation5 + $0x228] sm:$0xff]
    %v152 = vld [vmem:[#allocation5 + $0x230] sm:$0xff]
    %v153 = vld [vmem:[#allocation5 + $0x238] sm:$0xff]
    %v154 = vld [vmem:[#allocation5 + $0x240] sm:$0xff]
    %v155 = vld [vmem:[#allocation5 + $0x248] sm:$0xff]
    %v156 = vld [vmem:[#allocation5 + $0x250] sm:$0xff]
    %v157 = vld [vmem:[#allocation5 + $0x258] sm:$0xff]
    %v158 = vld [vmem:[#allocation5 + $0x260] sm:$0xff]
    %v159 = vld [vmem:[#allocation5 + $0x268] sm:$0xff]
    %v160 = vld [vmem:[#allocation5 + $0x270] sm:$0xff]
    %v161 = vld [vmem:[#allocation5 + $0x278] sm:$0xff]
    %v162 = vld [vmem:[#allocation5 + $0x280] sm:$0xff]
    %v163 = vld [vmem:[#allocation5 + $0x288] sm:$0xff]
    %v164 = vld [vmem:[#allocation5 + $0x290] sm:$0xff]
    %v165 = vld [vmem:[#allocation5 + $0x298] sm:$0xff]
    %v166 = vld [vmem:[#allocation5 + $0x2a0] sm:$0xff]
    %v167 = vld [vmem:[#allocation5 + $0x2a8] sm:$0xff]
    %v168 = vld [vmem:[#allocation5 + $0x2b0] sm:$0xff]
    %v169 = vld [vmem:[#allocation5 + $0x2b8] sm:$0xff]
    %v170 = vld [vmem:[#allocation5 + $0x2c0] sm:$0xff]
    %v171 = vld [vmem:[#allocation5 + $0x2c8] sm:$0xff]
    %v172 = vld [vmem:[#allocation5 + $0x2d0] sm:$0xff]
    %v173 = vld [vmem:[#allocation5 + $0x2d8] sm:$0xff]
    %v174 = vld [vmem:[#allocation5 + $0x2e0] sm:$0xff]
    %v175 = vld [vmem:[#allocation5 + $0x2e8] sm:$0xff]
    %v176 = vld [vmem:[#allocation5 + $0x2f0] sm:$0xff]
    %v177 = vld [vmem:[#allocation5 + $0x2f8] sm:$0xff]
    %v178 = vld [vmem:[#allocation5 + $0x300] sm:$0xff]
    %v179 = vld [vmem:[#allocation5 + $0x308] sm:$0xff]
    %v180 = vld [vmem:[#allocation5 + $0x310] sm:$0xff]
    %v181 = vld [vmem:[#allocation5 + $0x318] sm:$0xff]
    %v182 = vld [vmem:[#allocation5 + $0x320] sm:$0xff]
    %v183 = vld [vmem:[#allocation5 + $0x328] sm:$0xff]
    %v184 = vld [vmem:[#allocation5 + $0x330] sm:$0xff]
    %v185 = vld [vmem:[#allocation5 + $0x338] sm:$0xff]
    %v186 = vld [vmem:[#allocation5 + $0x340] sm:$0xff]
    %v187 = vld [vmem:[#allocation5 + $0x348] sm:$0xff]
    %v188 = vld [vmem:[#allocation5 + $0x350] sm:$0xff]
    %v189 = vld [vmem:[#allocation5 + $0x358] sm:$0xff]
    %v190 = vld [vmem:[#allocation5 + $0x360] sm:$0xff]
    %v191 = vld [vmem:[#allocation5 + $0x368] sm:$0xff]
    %v192 = vld [vmem:[#allocation5 + $0x370] sm:$0xff]
    %v193 = vld [vmem:[#allocation5 + $0x378] sm:$0xff]
    %v194 = vld [vmem:[#allocation5 + $0x380] sm:$0xff]
    %v195 = vld [vmem:[#allocation5 + $0x388] sm:$0xff]
    %v196 = vld [vmem:[#allocation5 + $0x390] sm:$0xff]
    %v197 = vld [vmem:[#allocation5 + $0x398] sm:$0xff]
    %v198 = vld [vmem:[#allocation5 + $0x3a0] sm:$0xff]
    %v199 = vld [vmem:[#allocation5 + $0x3a8] sm:$0xff]
    %v200 = vld [vmem:[#allocation5 + $0x3b0] sm:$0xff]
    %v201 = vld [vmem:[#allocation5 + $0x3b8] sm:$0xff]
    %v202 = vld [vmem:[#allocation5 + $0x3c0] sm:$0xff]
    %v203 = vld [vmem:[#allocation5 + $0x3c8] sm:$0xff]
    %v204 = vld [vmem:[#allocation5 + $0x3d0] sm:$0xff]
    %v205 = vld [vmem:[#allocation5 + $0x3d8] sm:$0xff]
    %v206 = vld [vmem:[#allocation5 + $0x3e0] sm:$0xff]
    %v207 = vld [vmem:[#allocation5 + $0x3e8] sm:$0xff]
    %v208 = vld [vmem:[#allocation5 + $0x3f0] sm:$0xff]
    %v209 = vld [vmem:[#allocation5 + $0x3f8] sm:$0xff]
    %v210 = vld [vmem:[#allocation5 + $0x400] sm:$0xff]
    %v211 = vld [vmem:[#allocation5 + $0x408] sm:$0xff]
    %v212 = vld [vmem:[#allocation5 + $0x410] sm:$0xff]
    %v213 = vld [vmem:[#allocation5 + $0x418] sm:$0xff]
    %v214 = vld [vmem:[#allocation5 + $0x420] sm:$0xff]
    %v215 = vld [vmem:[#allocation5 + $0x428] sm:$0xff]
    %v216 = vld [vmem:[#allocation5 + $0x430] sm:$0xff]
    %v217 = vld [vmem:[#allocation5 + $0x438] sm:$0xff]
    %v218 = vld [vmem:[#allocation5 + $0x440] sm:$0xff]
    %v219 = vld [vmem:[#allocation5 + $0x448] sm:$0xff]
    %v220 = vld [vmem:[#allocation5 + $0x450] sm:$0xff]
    %v221 = vld [vmem:[#allocation5 + $0x458] sm:$0xff]
    %v222 = vld [vmem:[#allocation5 + $0x460] sm:$0xff]
    %v223 = vld [vmem:[#allocation5 + $0x468] sm:$0xff]
    %v224 = vld [vmem:[#allocation5 + $0x470] sm:$0xff]
    %v225 = vld [vmem:[#allocation5 + $0x478] sm:$0xff]
    %v226 = vld [vmem:[#allocation5 + $0x480] sm:$0xff]
    %v227 = vld [vmem:[#allocation5 + $0x488] sm:$0xff]
    %v228 = vld [vmem:[#allocation5 + $0x490] sm:$0xff]
    %v229 = vld [vmem:[#allocation5 + $0x498] sm:$0xff]
    %v230 = vld [vmem:[#allocation5 + $0x4a0] sm:$0xff]
    %v231 = vld [vmem:[#allocation5 + $0x4a8] sm:$0xff]
    %v232 = vld [vmem:[#allocation5 + $0x4b0] sm:$0xff]
    %v233 = vld [vmem:[#allocation5 + $0x4b8] sm:$0xff]
    %v234 = vld [vmem:[#allocation5 + $0x4c0] sm:$0xff]
    %v235 = vld [vmem:[#allocation5 + $0x4c8] sm:$0xff]
    %v236 = vld [vmem:[#allocation5 + $0x4d0] sm:$0xff]
    %v237 = vld [vmem:[#allocation5 + $0x4d8] sm:$0xff]
    %v238 = vld [vmem:[#allocation5 + $0x4e0] sm:$0xff]
    %v239 = vld [vmem:[#allocation5 + $0x4e8] sm:$0xff]
    %v240 = vld [vmem:[#allocation5 + $0x4f0] sm:$0xff]
    %v241 = vld [vmem:[#allocation5 + $0x4f8] sm:$0xff]
    %v242 = vld [vmem:[#allocation5 + $0x500] sm:$0xff]
    %v243 = vld [vmem:[#allocation5 + $0x508] sm:$0xff]
    %v244 = vld [vmem:[#allocation5 + $0x510] sm:$0xff]
    %v245 = vld [vmem:[#allocation5 + $0x518] sm:$0xff]
    %v246 = vld [vmem:[#allocation5 + $0x520] sm:$0xff]
    %v247 = vld [vmem:[#allocation5 + $0x528] sm:$0xff]
    %v248 = vld [vmem:[#allocation5 + $0x530] sm:$0xff]
    %v249 = vld [vmem:[#allocation5 + $0x538] sm:$0xff]
    %v250 = vld [vmem:[#allocation5 + $0x540] sm:$0xff]
    %v251 = vld [vmem:[#allocation5 + $0x548] sm:$0xff]
    %v252 = vld [vmem:[#allocation5 + $0x550] sm:$0xff]
    %v253 = vld [vmem:[#allocation5 + $0x558] sm:$0xff]
    %v254 = vld [vmem:[#allocation5 + $0x560] sm:$0xff]
    %v255 = vld [vmem:[#allocation5 + $0x568] sm:$0xff]
    %v256 = vld [vmem:[#allocation5 + $0x570] sm:$0xff]
    %v257 = vld [vmem:[#allocation5 + $0x578] sm:$0xff]
    %v258 = vld [vmem:[#allocation5 + $0x580] sm:$0xff]
    %v259 = vld [vmem:[#allocation5 + $0x588] sm:$0xff]
    %v260 = vld [vmem:[#allocation5 + $0x590] sm:$0xff]
    %v261 = vld [vmem:[#allocation5 + $0x598] sm:$0xff]
    %v262 = vld [vmem:[#allocation5 + $0x5a0] sm:$0xff]
    %v263 = vld [vmem:[#allocation5 + $0x5a8] sm:$0xff]
    %v264 = vld [vmem:[#allocation5 + $0x5b0] sm:$0xff]
    %v265 = vld [vmem:[#allocation5 + $0x5b8] sm:$0xff]
    %v266 = vld [vmem:[#allocation5 + $0x5c0] sm:$0xff]
    %v267 = vld [vmem:[#allocation5 + $0x5c8] sm:$0xff]
    %v268 = vld [vmem:[#allocation5 + $0x5d0] sm:$0xff]
    %v269 = vld [vmem:[#allocation5 + $0x5d8] sm:$0xff]
    %v270 = vld [vmem:[#allocation5 + $0x5e0] sm:$0xff]
    %v271 = vld [vmem:[#allocation5 + $0x5e8] sm:$0xff]
    %v272 = vld [vmem:[#allocation5 + $0x5f0] sm:$0xff]
    %v273 = vld [vmem:[#allocation5 + $0x5f8] sm:$0xff]
    %v274 = vld [vmem:[#allocation5 + $0x600] sm:$0xff]
    %v275 = vld [vmem:[#allocation5 + $0x608] sm:$0xff]
    %v276 = vld [vmem:[#allocation5 + $0x610] sm:$0xff]
    %v277 = vld [vmem:[#allocation5 + $0x618] sm:$0xff]
    %v278 = vld [vmem:[#allocation5 + $0x620] sm:$0xff]
    %v279 = vld [vmem:[#allocation5 + $0x628] sm:$0xff]
    %v280 = vld [vmem:[#allocation5 + $0x630] sm:$0xff]
    %v281 = vld [vmem:[#allocation5 + $0x638] sm:$0xff]
    %v282 = vld [vmem:[#allocation5 + $0x640] sm:$0xff]
    %v283 = vld [vmem:[#allocation5 + $0x648] sm:$0xff]
    %v284 = vld [vmem:[#allocation5 + $0x650] sm:$0xff]
    %v285 = vld [vmem:[#allocation5 + $0x658] sm:$0xff]
    %v286 = vld [vmem:[#allocation5 + $0x660] sm:$0xff]
    %v287 = vld [vmem:[#allocation5 + $0x668] sm:$0xff]
    %v288 = vld [vmem:[#allocation5 + $0x670] sm:$0xff]
    %v289 = vld [vmem:[#allocation5 + $0x678] sm:$0xff]
    %v290 = vld [vmem:[#allocation5 + $0x680] sm:$0xff]
    %v291 = vld [vmem:[#allocation5 + $0x688] sm:$0xff]
    %v292 = vld [vmem:[#allocation5 + $0x690] sm:$0xff]
    %v293 = vld [vmem:[#allocation5 + $0x698] sm:$0xff]
    %v294 = vld [vmem:[#allocation5 + $0x6a0] sm:$0xff]
    %v295 = vld [vmem:[#allocation5 + $0x6a8] sm:$0xff]
    %v296 = vld [vmem:[#allocation5 + $0x6b0] sm:$0xff]
    %v297 = vld [vmem:[#allocation5 + $0x6b8] sm:$0xff]
    %v298 = vld [vmem:[#allocation5 + $0x6c0] sm:$0xff]
    %v299 = vld [vmem:[#allocation5 + $0x6c8] sm:$0xff]
    %v300 = vld [vmem:[#allocation5 + $0x6d0] sm:$0xff]
    %v301 = vld [vmem:[#allocation5 + $0x6d8] sm:$0xff]
    %v302 = vld [vmem:[#allocation5 + $0x6e0] sm:$0xff]
    %v303 = vld [vmem:[#allocation5 + $0x6e8] sm:$0xff]
    %v304 = vld [vmem:[#allocation5 + $0x6f0] sm:$0xff]
    %v305 = vld [vmem:[#allocation5 + $0x6f8] sm:$0xff]
    %v306 = vld [vmem:[#allocation5 + $0x700] sm:$0xff]
    %v307 = vld [vmem:[#allocation5 + $0x708] sm:$0xff]
    %v308 = vld [vmem:[#allocation5 + $0x710] sm:$0xff]
    %v309 = vld [vmem:[#allocation5 + $0x718] sm:$0xff]
    %v310 = vld [vmem:[#allocation5 + $0x720] sm:$0xff]
    %v311 = vld [vmem:[#allocation5 + $0x728] sm:$0xff]
    %v312 = vld [vmem:[#allocation5 + $0x730] sm:$0xff]
    %v313 = vld [vmem:[#allocation5 + $0x738] sm:$0xff]
    %v314 = vld [vmem:[#allocation5 + $0x740] sm:$0xff]
    %v315 = vld [vmem:[#allocation5 + $0x748] sm:$0xff]
    %v316 = vld [vmem:[#allocation5 + $0x750] sm:$0xff]
    %v317 = vld [vmem:[#allocation5 + $0x758] sm:$0xff]
    %v318 = vld [vmem:[#allocation5 + $0x760] sm:$0xff]
    %v319 = vld [vmem:[#allocation5 + $0x768] sm:$0xff]
    %v320 = vld [vmem:[#allocation5 + $0x770] sm:$0xff]
    %v321 = vld [vmem:[#allocation5 + $0x778] sm:$0xff]
    %v322 = vld [vmem:[#allocation5 + $0x780] sm:$0xff]
    %v323 = vld [vmem:[#allocation5 + $0x788] sm:$0xff]
    %v324 = vld [vmem:[#allocation5 + $0x790] sm:$0xff]
    %v325 = vld [vmem:[#allocation5 + $0x798] sm:$0xff]
    %v326 = vld [vmem:[#allocation5 + $0x7a0] sm:$0xff]
    %v327 = vld [vmem:[#allocation5 + $0x7a8] sm:$0xff]
    %v328 = vld [vmem:[#allocation5 + $0x7b0] sm:$0xff]
    %v329 = vld [vmem:[#allocation5 + $0x7b8] sm:$0xff]
    %v330 = vld [vmem:[#allocation5 + $0x7c0] sm:$0xff]
    %v331 = vld [vmem:[#allocation5 + $0x7c8] sm:$0xff]
    %v332 = vld [vmem:[#allocation5 + $0x7d0] sm:$0xff]
    %v333 = vld [vmem:[#allocation5 + $0x7d8] sm:$0xff]
    %v334 = vld [vmem:[#allocation5 + $0x7e0] sm:$0xff]
    %v335 = vld [vmem:[#allocation5 + $0x7e8] sm:$0xff]
    %v336 = vld [vmem:[#allocation5 + $0x7f0] sm:$0xff]
    %v337 = vld [vmem:[#allocation5 + $0x7f8] sm:$0xff]
    %v338 = vld [vmem:[%s2] sm:$0xf]
    %v340 = vlaneseq
    %v341 = vshrl.u32 %v340, 7
    %v342 = vsub.s32 0, %v341
    %v343 = vrot.slane %v338, %v342
    %v344 = vlaneseq
    %v345 = vshrl.u32 %v344, 7
    %v346 = vsub.s32 1, %v345
    %v347 = vrot.slane %v338, %v346
    %v348 = vlaneseq
    %v349 = vshrl.u32 %v348, 7
    %v350 = vsub.s32 2, %v349
    %v351 = vrot.slane %v338, %v350
    %v352 = vlaneseq
    %v353 = vshrl.u32 %v352, 7
    %v354 = vsub.s32 3, %v353
    %v355 = vrot.slane %v338, %v354
    %v616 = vunpack.c.l.b16 %v82
    %v617 = vunpack.c.h.b16 %v82
    %v618 = vunpack.c.l.b16 %v83
    %v619 = vunpack.c.h.b16 %v83
    %v620 = vunpack.c.l.b16 %v84
    %v621 = vunpack.c.h.b16 %v84
    %v622 = vunpack.c.l.b16 %v85
    %v623 = vunpack.c.h.b16 %v85
    %v624 = vunpack.c.l.b16 %v86
    %v625 = vunpack.c.h.b16 %v86
    %v626 = vunpack.c.l.b16 %v87
    %v627 = vunpack.c.h.b16 %v87
    %v628 = vunpack.c.l.b16 %v88
    %v629 = vunpack.c.h.b16 %v88
    %v630 = vunpack.c.l.b16 %v89
    %v631 = vunpack.c.h.b16 %v89
    %v632 = vunpack.c.l.b16 %v90
    %v633 = vunpack.c.h.b16 %v90
    %v634 = vunpack.c.l.b16 %v91
    %v635 = vunpack.c.h.b16 %v91
    %v636 = vunpack.c.l.b16 %v92
    %v637 = vunpack.c.h.b16 %v92
    %v638 = vunpack.c.l.b16 %v93
    %v639 = vunpack.c.h.b16 %v93
    %v640 = vunpack.c.l.b16 %v94
    %v641 = vunpack.c.h.b16 %v94
    %v642 = vunpack.c.l.b16 %v95
    %v643 = vunpack.c.h.b16 %v95
    %v644 = vunpack.c.l.b16 %v96
    %v645 = vunpack.c.h.b16 %v96
    %v646 = vunpack.c.l.b16 %v97
    %v647 = vunpack.c.h.b16 %v97
    %v648 = vunpack.c.l.b16 %v98
    %v649 = vunpack.c.h.b16 %v98
    %v650 = vunpack.c.l.b16 %v99
    %v651 = vunpack.c.h.b16 %v99
    %v652 = vunpack.c.l.b16 %v100
    %v653 = vunpack.c.h.b16 %v100
    %v654 = vunpack.c.l.b16 %v101
    %v655 = vunpack.c.h.b16 %v101
    %v656 = vunpack.c.l.b16 %v102
    %v657 = vunpack.c.h.b16 %v102
    %v658 = vunpack.c.l.b16 %v103
    %v659 = vunpack.c.h.b16 %v103
    %v660 = vunpack.c.l.b16 %v104
    %v661 = vunpack.c.h.b16 %v104
    %v662 = vunpack.c.l.b16 %v105
    %v663 = vunpack.c.h.b16 %v105
    %v664 = vunpack.c.l.b16 %v106
    %v665 = vunpack.c.h.b16 %v106
    %v666 = vunpack.c.l.b16 %v107
    %v667 = vunpack.c.h.b16 %v107
    %v668 = vunpack.c.l.b16 %v108
    %v669 = vunpack.c.h.b16 %v108
    %v670 = vunpack.c.l.b16 %v109
    %v671 = vunpack.c.h.b16 %v109
    %v672 = vunpack.c.l.b16 %v110
    %v673 = vunpack.c.h.b16 %v110
    %v674 = vunpack.c.l.b16 %v111
    %v675 = vunpack.c.h.b16 %v111
    %v676 = vunpack.c.l.b16 %v112
    %v677 = vunpack.c.h.b16 %v112
    %v678 = vunpack.c.l.b16 %v113
    %v679 = vunpack.c.h.b16 %v113
    %v680 = vunpack.c.l.b16 %v114
    %v681 = vunpack.c.h.b16 %v114
    %v682 = vunpack.c.l.b16 %v115
    %v683 = vunpack.c.h.b16 %v115
    %v684 = vunpack.c.l.b16 %v116
    %v685 = vunpack.c.h.b16 %v116
    %v686 = vunpack.c.l.b16 %v117
    %v687 = vunpack.c.h.b16 %v117
    %v688 = vunpack.c.l.b16 %v118
    %v689 = vunpack.c.h.b16 %v118
    %v690 = vunpack.c.l.b16 %v119
    %v691 = vunpack.c.h.b16 %v119
    %v692 = vunpack.c.l.b16 %v120
    %v693 = vunpack.c.h.b16 %v120
    %v694 = vunpack.c.l.b16 %v121
    %v695 = vunpack.c.h.b16 %v121
    %v696 = vunpack.c.l.b16 %v122
    %v697 = vunpack.c.h.b16 %v122
    %v698 = vunpack.c.l.b16 %v123
    %v699 = vunpack.c.h.b16 %v123
    %v700 = vunpack.c.l.b16 %v124
    %v701 = vunpack.c.h.b16 %v124
    %v702 = vunpack.c.l.b16 %v125
    %v703 = vunpack.c.h.b16 %v125
    %v704 = vunpack.c.l.b16 %v126
    %v705 = vunpack.c.h.b16 %v126
    %v706 = vunpack.c.l.b16 %v127
    %v707 = vunpack.c.h.b16 %v127
    %v708 = vunpack.c.l.b16 %v128
    %v709 = vunpack.c.h.b16 %v128
    %v710 = vunpack.c.l.b16 %v129
    %v711 = vunpack.c.h.b16 %v129
    %v712 = vunpack.c.l.b16 %v130
    %v713 = vunpack.c.h.b16 %v130
    %v714 = vunpack.c.l.b16 %v131
    %v715 = vunpack.c.h.b16 %v131
    %v716 = vunpack.c.l.b16 %v132
    %v717 = vunpack.c.h.b16 %v132
    %v718 = vunpack.c.l.b16 %v133
    %v719 = vunpack.c.h.b16 %v133
    %v720 = vunpack.c.l.b16 %v134
    %v721 = vunpack.c.h.b16 %v134
    %v722 = vunpack.c.l.b16 %v135
    %v723 = vunpack.c.h.b16 %v135
    %v724 = vunpack.c.l.b16 %v136
    %v725 = vunpack.c.h.b16 %v136
    %v726 = vunpack.c.l.b16 %v137
    %v727 = vunpack.c.h.b16 %v137
    %v728 = vunpack.c.l.b16 %v138
    %v729 = vunpack.c.h.b16 %v138
    %v730 = vunpack.c.l.b16 %v139
    %v731 = vunpack.c.h.b16 %v139
    %v732 = vunpack.c.l.b16 %v140
    %v733 = vunpack.c.h.b16 %v140
    %v734 = vunpack.c.l.b16 %v141
    %v735 = vunpack.c.h.b16 %v141
    %v736 = vunpack.c.l.b16 %v142
    %v737 = vunpack.c.h.b16 %v142
    %v738 = vunpack.c.l.b16 %v143
    %v739 = vunpack.c.h.b16 %v143
    %v740 = vunpack.c.l.b16 %v144
    %v741 = vunpack.c.h.b16 %v144
    %v742 = vunpack.c.l.b16 %v145
    %v743 = vunpack.c.h.b16 %v145
    %v744 = vunpack.c.l.b16 %v146
    %v745 = vunpack.c.h.b16 %v146
    %v746 = vunpack.c.l.b16 %v147
    %v747 = vunpack.c.h.b16 %v147
    %v748 = vunpack.c.l.b16 %v148
    %v749 = vunpack.c.h.b16 %v148
    %v750 = vunpack.c.l.b16 %v149
    %v751 = vunpack.c.h.b16 %v149
    %v752 = vunpack.c.l.b16 %v150
    %v753 = vunpack.c.h.b16 %v150
    %v754 = vunpack.c.l.b16 %v151
    %v755 = vunpack.c.h.b16 %v151
    %v756 = vunpack.c.l.b16 %v152
    %v757 = vunpack.c.h.b16 %v152
    %v758 = vunpack.c.l.b16 %v153
    %v759 = vunpack.c.h.b16 %v153
    %v760 = vunpack.c.l.b16 %v154
    %v761 = vunpack.c.h.b16 %v154
    %v762 = vunpack.c.l.b16 %v155
    %v763 = vunpack.c.h.b16 %v155
    %v764 = vunpack.c.l.b16 %v156
    %v765 = vunpack.c.h.b16 %v156
    %v766 = vunpack.c.l.b16 %v157
    %v767 = vunpack.c.h.b16 %v157
    %v768 = vunpack.c.l.b16 %v158
    %v769 = vunpack.c.h.b16 %v158
    %v770 = vunpack.c.l.b16 %v159
    %v771 = vunpack.c.h.b16 %v159
    %v772 = vunpack.c.l.b16 %v160
    %v773 = vunpack.c.h.b16 %v160
    %v774 = vunpack.c.l.b16 %v161
    %v775 = vunpack.c.h.b16 %v161
    %v776 = vunpack.c.l.b16 %v162
    %v777 = vunpack.c.h.b16 %v162
    %v778 = vunpack.c.l.b16 %v163
    %v779 = vunpack.c.h.b16 %v163
    %v780 = vunpack.c.l.b16 %v164
    %v781 = vunpack.c.h.b16 %v164
    %v782 = vunpack.c.l.b16 %v165
    %v783 = vunpack.c.h.b16 %v165
    %v784 = vunpack.c.l.b16 %v166
    %v785 = vunpack.c.h.b16 %v166
    %v786 = vunpack.c.l.b16 %v167
    %v787 = vunpack.c.h.b16 %v167
    %v788 = vunpack.c.l.b16 %v168
    %v789 = vunpack.c.h.b16 %v168
    %v790 = vunpack.c.l.b16 %v169
    %v791 = vunpack.c.h.b16 %v169
    %v792 = vunpack.c.l.b16 %v170
    %v793 = vunpack.c.h.b16 %v170
    %v794 = vunpack.c.l.b16 %v171
    %v795 = vunpack.c.h.b16 %v171
    %v796 = vunpack.c.l.b16 %v172
    %v797 = vunpack.c.h.b16 %v172
    %v798 = vunpack.c.l.b16 %v173
    %v799 = vunpack.c.h.b16 %v173
    %v800 = vunpack.c.l.b16 %v174
    %v801 = vunpack.c.h.b16 %v174
    %v802 = vunpack.c.l.b16 %v175
    %v803 = vunpack.c.h.b16 %v175
    %v804 = vunpack.c.l.b16 %v176
    %v805 = vunpack.c.h.b16 %v176
    %v806 = vunpack.c.l.b16 %v177
    %v807 = vunpack.c.h.b16 %v177
    %v808 = vunpack.c.l.b16 %v178
    %v809 = vunpack.c.h.b16 %v178
    %v810 = vunpack.c.l.b16 %v179
    %v811 = vunpack.c.h.b16 %v179
    %v812 = vunpack.c.l.b16 %v180
    %v813 = vunpack.c.h.b16 %v180
    %v814 = vunpack.c.l.b16 %v181
    %v815 = vunpack.c.h.b16 %v181
    %v816 = vunpack.c.l.b16 %v182
    %v817 = vunpack.c.h.b16 %v182
    %v818 = vunpack.c.l.b16 %v183
    %v819 = vunpack.c.h.b16 %v183
    %v820 = vunpack.c.l.b16 %v184
    %v821 = vunpack.c.h.b16 %v184
    %v822 = vunpack.c.l.b16 %v185
    %v823 = vunpack.c.h.b16 %v185
    %v824 = vunpack.c.l.b16 %v186
    %v825 = vunpack.c.h.b16 %v186
    %v826 = vunpack.c.l.b16 %v187
    %v827 = vunpack.c.h.b16 %v187
    %v828 = vunpack.c.l.b16 %v188
    %v829 = vunpack.c.h.b16 %v188
    %v830 = vunpack.c.l.b16 %v189
    %v831 = vunpack.c.h.b16 %v189
    %v832 = vunpack.c.l.b16 %v190
    %v833 = vunpack.c.h.b16 %v190
    %v834 = vunpack.c.l.b16 %v191
    %v835 = vunpack.c.h.b16 %v191
    %v836 = vunpack.c.l.b16 %v192
    %v837 = vunpack.c.h.b16 %v192
    %v838 = vunpack.c.l.b16 %v193
    %v839 = vunpack.c.h.b16 %v193
    %v840 = vunpack.c.l.b16 %v194
    %v841 = vunpack.c.h.b16 %v194
    %v842 = vunpack.c.l.b16 %v195
    %v843 = vunpack.c.h.b16 %v195
    %v844 = vunpack.c.l.b16 %v196
    %v845 = vunpack.c.h.b16 %v196
    %v846 = vunpack.c.l.b16 %v197
    %v847 = vunpack.c.h.b16 %v197
    %v848 = vunpack.c.l.b16 %v198
    %v849 = vunpack.c.h.b16 %v198
    %v850 = vunpack.c.l.b16 %v199
    %v851 = vunpack.c.h.b16 %v199
    %v852 = vunpack.c.l.b16 %v200
    %v853 = vunpack.c.h.b16 %v200
    %v854 = vunpack.c.l.b16 %v201
    %v855 = vunpack.c.h.b16 %v201
    %v856 = vunpack.c.l.b16 %v202
    %v857 = vunpack.c.h.b16 %v202
    %v858 = vunpack.c.l.b16 %v203
    %v859 = vunpack.c.h.b16 %v203
    %v860 = vunpack.c.l.b16 %v204
    %v861 = vunpack.c.h.b16 %v204
    %v862 = vunpack.c.l.b16 %v205
    %v863 = vunpack.c.h.b16 %v205
    %v864 = vunpack.c.l.b16 %v206
    %v865 = vunpack.c.h.b16 %v206
    %v866 = vunpack.c.l.b16 %v207
    %v867 = vunpack.c.h.b16 %v207
    %v868 = vunpack.c.l.b16 %v208
    %v869 = vunpack.c.h.b16 %v208
    %v870 = vunpack.c.l.b16 %v209
    %v871 = vunpack.c.h.b16 %v209
    %v872 = vunpack.c.l.b16 %v210
    %v873 = vunpack.c.h.b16 %v210
    %v874 = vunpack.c.l.b16 %v211
    %v875 = vunpack.c.h.b16 %v211
    %v876 = vunpack.c.l.b16 %v212
    %v877 = vunpack.c.h.b16 %v212
    %v878 = vunpack.c.l.b16 %v213
    %v879 = vunpack.c.h.b16 %v213
    %v880 = vunpack.c.l.b16 %v214
    %v881 = vunpack.c.h.b16 %v214
    %v882 = vunpack.c.l.b16 %v215
    %v883 = vunpack.c.h.b16 %v215
    %v884 = vunpack.c.l.b16 %v216
    %v885 = vunpack.c.h.b16 %v216
    %v886 = vunpack.c.l.b16 %v217
    %v887 = vunpack.c.h.b16 %v217
    %v888 = vunpack.c.l.b16 %v218
    %v889 = vunpack.c.h.b16 %v218
    %v890 = vunpack.c.l.b16 %v219
    %v891 = vunpack.c.h.b16 %v219
    %v892 = vunpack.c.l.b16 %v220
    %v893 = vunpack.c.h.b16 %v220
    %v894 = vunpack.c.l.b16 %v221
    %v895 = vunpack.c.h.b16 %v221
    %v896 = vunpack.c.l.b16 %v222
    %v897 = vunpack.c.h.b16 %v222
    %v898 = vunpack.c.l.b16 %v223
    %v899 = vunpack.c.h.b16 %v223
    %v900 = vunpack.c.l.b16 %v224
    %v901 = vunpack.c.h.b16 %v224
    %v902 = vunpack.c.l.b16 %v225
    %v903 = vunpack.c.h.b16 %v225
    %v904 = vunpack.c.l.b16 %v226
    %v905 = vunpack.c.h.b16 %v226
    %v906 = vunpack.c.l.b16 %v227
    %v907 = vunpack.c.h.b16 %v227
    %v908 = vunpack.c.l.b16 %v228
    %v909 = vunpack.c.h.b16 %v228
    %v910 = vunpack.c.l.b16 %v229
    %v911 = vunpack.c.h.b16 %v229
    %v912 = vunpack.c.l.b16 %v230
    %v913 = vunpack.c.h.b16 %v230
    %v914 = vunpack.c.l.b16 %v231
    %v915 = vunpack.c.h.b16 %v231
    %v916 = vunpack.c.l.b16 %v232
    %v917 = vunpack.c.h.b16 %v232
    %v918 = vunpack.c.l.b16 %v233
    %v919 = vunpack.c.h.b16 %v233
    %v920 = vunpack.c.l.b16 %v234
    %v921 = vunpack.c.h.b16 %v234
    %v922 = vunpack.c.l.b16 %v235
    %v923 = vunpack.c.h.b16 %v235
    %v924 = vunpack.c.l.b16 %v236
    %v925 = vunpack.c.h.b16 %v236
    %v926 = vunpack.c.l.b16 %v237
    %v927 = vunpack.c.h.b16 %v237
    %v928 = vunpack.c.l.b16 %v238
    %v929 = vunpack.c.h.b16 %v238
    %v930 = vunpack.c.l.b16 %v239
    %v931 = vunpack.c.h.b16 %v239
    %v932 = vunpack.c.l.b16 %v240
    %v933 = vunpack.c.h.b16 %v240
    %v934 = vunpack.c.l.b16 %v241
    %v935 = vunpack.c.h.b16 %v241
    %v936 = vunpack.c.l.b16 %v242
    %v937 = vunpack.c.h.b16 %v242
    %v938 = vunpack.c.l.b16 %v243
    %v939 = vunpack.c.h.b16 %v243
    %v940 = vunpack.c.l.b16 %v244
    %v941 = vunpack.c.h.b16 %v244
    %v942 = vunpack.c.l.b16 %v245
    %v943 = vunpack.c.h.b16 %v245
    %v944 = vunpack.c.l.b16 %v246
    %v945 = vunpack.c.h.b16 %v246
    %v946 = vunpack.c.l.b16 %v247
    %v947 = vunpack.c.h.b16 %v247
    %v948 = vunpack.c.l.b16 %v248
    %v949 = vunpack.c.h.b16 %v248
    %v950 = vunpack.c.l.b16 %v249
    %v951 = vunpack.c.h.b16 %v249
    %v952 = vunpack.c.l.b16 %v250
    %v953 = vunpack.c.h.b16 %v250
    %v954 = vunpack.c.l.b16 %v251
    %v955 = vunpack.c.h.b16 %v251
    %v956 = vunpack.c.l.b16 %v252
    %v957 = vunpack.c.h.b16 %v252
    %v958 = vunpack.c.l.b16 %v253
    %v959 = vunpack.c.h.b16 %v253
    %v960 = vunpack.c.l.b16 %v254
    %v961 = vunpack.c.h.b16 %v254
    %v962 = vunpack.c.l.b16 %v255
    %v963 = vunpack.c.h.b16 %v255
    %v964 = vunpack.c.l.b16 %v256
    %v965 = vunpack.c.h.b16 %v256
    %v966 = vunpack.c.l.b16 %v257
    %v967 = vunpack.c.h.b16 %v257
    %v968 = vunpack.c.l.b16 %v258
    %v969 = vunpack.c.h.b16 %v258
    %v970 = vunpack.c.l.b16 %v259
    %v971 = vunpack.c.h.b16 %v259
    %v972 = vunpack.c.l.b16 %v260
    %v973 = vunpack.c.h.b16 %v260
    %v974 = vunpack.c.l.b16 %v261
    %v975 = vunpack.c.h.b16 %v261
    %v976 = vunpack.c.l.b16 %v262
    %v977 = vunpack.c.h.b16 %v262
    %v978 = vunpack.c.l.b16 %v263
    %v979 = vunpack.c.h.b16 %v263
    %v980 = vunpack.c.l.b16 %v264
    %v981 = vunpack.c.h.b16 %v264
    %v982 = vunpack.c.l.b16 %v265
    %v983 = vunpack.c.h.b16 %v265
    %v984 = vunpack.c.l.b16 %v266
    %v985 = vunpack.c.h.b16 %v266
    %v986 = vunpack.c.l.b16 %v267
    %v987 = vunpack.c.h.b16 %v267
    %v988 = vunpack.c.l.b16 %v268
    %v989 = vunpack.c.h.b16 %v268
    %v990 = vunpack.c.l.b16 %v269
    %v991 = vunpack.c.h.b16 %v269
    %v992 = vunpack.c.l.b16 %v270
    %v993 = vunpack.c.h.b16 %v270
    %v994 = vunpack.c.l.b16 %v271
    %v995 = vunpack.c.h.b16 %v271
    %v996 = vunpack.c.l.b16 %v272
    %v997 = vunpack.c.h.b16 %v272
    %v998 = vunpack.c.l.b16 %v273
    %v999 = vunpack.c.h.b16 %v273
    %v1000 = vunpack.c.l.b16 %v274
    %v1001 = vunpack.c.h.b16 %v274
    %v1002 = vunpack.c.l.b16 %v275
    %v1003 = vunpack.c.h.b16 %v275
    %v1004 = vunpack.c.l.b16 %v276
    %v1005 = vunpack.c.h.b16 %v276
    %v1006 = vunpack.c.l.b16 %v277
    %v1007 = vunpack.c.h.b16 %v277
    %v1008 = vunpack.c.l.b16 %v278
    %v1009 = vunpack.c.h.b16 %v278
    %v1010 = vunpack.c.l.b16 %v279
    %v1011 = vunpack.c.h.b16 %v279
    %v1012 = vunpack.c.l.b16 %v280
    %v1013 = vunpack.c.h.b16 %v280
    %v1014 = vunpack.c.l.b16 %v281
    %v1015 = vunpack.c.h.b16 %v281
    %v1016 = vunpack.c.l.b16 %v282
    %v1017 = vunpack.c.h.b16 %v282
    %v1018 = vunpack.c.l.b16 %v283
    %v1019 = vunpack.c.h.b16 %v283
    %v1020 = vunpack.c.l.b16 %v284
    %v1021 = vunpack.c.h.b16 %v284
    %v1022 = vunpack.c.l.b16 %v285
    %v1023 = vunpack.c.h.b16 %v285
    %v1024 = vunpack.c.l.b16 %v286
    %v1025 = vunpack.c.h.b16 %v286
    %v1026 = vunpack.c.l.b16 %v287
    %v1027 = vunpack.c.h.b16 %v287
    %v1028 = vunpack.c.l.b16 %v288
    %v1029 = vunpack.c.h.b16 %v288
    %v1030 = vunpack.c.l.b16 %v289
    %v1031 = vunpack.c.h.b16 %v289
    %v1032 = vunpack.c.l.b16 %v290
    %v1033 = vunpack.c.h.b16 %v290
    %v1034 = vunpack.c.l.b16 %v291
    %v1035 = vunpack.c.h.b16 %v291
    %v1036 = vunpack.c.l.b16 %v292
    %v1037 = vunpack.c.h.b16 %v292
    %v1038 = vunpack.c.l.b16 %v293
    %v1039 = vunpack.c.h.b16 %v293
    %v1040 = vunpack.c.l.b16 %v294
    %v1041 = vunpack.c.h.b16 %v294
    %v1042 = vunpack.c.l.b16 %v295
    %v1043 = vunpack.c.h.b16 %v295
    %v1044 = vunpack.c.l.b16 %v296
    %v1045 = vunpack.c.h.b16 %v296
    %v1046 = vunpack.c.l.b16 %v297
    %v1047 = vunpack.c.h.b16 %v297
    %v1048 = vunpack.c.l.b16 %v298
    %v1049 = vunpack.c.h.b16 %v298
    %v1050 = vunpack.c.l.b16 %v299
    %v1051 = vunpack.c.h.b16 %v299
    %v1052 = vunpack.c.l.b16 %v300
    %v1053 = vunpack.c.h.b16 %v300
    %v1054 = vunpack.c.l.b16 %v301
    %v1055 = vunpack.c.h.b16 %v301
    %v1056 = vunpack.c.l.b16 %v302
    %v1057 = vunpack.c.h.b16 %v302
    %v1058 = vunpack.c.l.b16 %v303
    %v1059 = vunpack.c.h.b16 %v303
    %v1060 = vunpack.c.l.b16 %v304
    %v1061 = vunpack.c.h.b16 %v304
    %v1062 = vunpack.c.l.b16 %v305
    %v1063 = vunpack.c.h.b16 %v305
    %v1064 = vunpack.c.l.b16 %v306
    %v1065 = vunpack.c.h.b16 %v306
    %v1066 = vunpack.c.l.b16 %v307
    %v1067 = vunpack.c.h.b16 %v307
    %v1068 = vunpack.c.l.b16 %v308
    %v1069 = vunpack.c.h.b16 %v308
    %v1070 = vunpack.c.l.b16 %v309
    %v1071 = vunpack.c.h.b16 %v309
    %v1072 = vunpack.c.l.b16 %v310
    %v1073 = vunpack.c.h.b16 %v310
    %v1074 = vunpack.c.l.b16 %v311
    %v1075 = vunpack.c.h.b16 %v311
    %v1076 = vunpack.c.l.b16 %v312
    %v1077 = vunpack.c.h.b16 %v312
    %v1078 = vunpack.c.l.b16 %v313
    %v1079 = vunpack.c.h.b16 %v313
    %v1080 = vunpack.c.l.b16 %v314
    %v1081 = vunpack.c.h.b16 %v314
    %v1082 = vunpack.c.l.b16 %v315
    %v1083 = vunpack.c.h.b16 %v315
    %v1084 = vunpack.c.l.b16 %v316
    %v1085 = vunpack.c.h.b16 %v316
    %v1086 = vunpack.c.l.b16 %v317
    %v1087 = vunpack.c.h.b16 %v317
    %v1088 = vunpack.c.l.b16 %v318
    %v1089 = vunpack.c.h.b16 %v318
    %v1090 = vunpack.c.l.b16 %v319
    %v1091 = vunpack.c.h.b16 %v319
    %v1092 = vunpack.c.l.b16 %v320
    %v1093 = vunpack.c.h.b16 %v320
    %v1094 = vunpack.c.l.b16 %v321
    %v1095 = vunpack.c.h.b16 %v321
    %v1096 = vunpack.c.l.b16 %v322
    %v1097 = vunpack.c.h.b16 %v322
    %v1098 = vunpack.c.l.b16 %v323
    %v1099 = vunpack.c.h.b16 %v323
    %v1100 = vunpack.c.l.b16 %v324
    %v1101 = vunpack.c.h.b16 %v324
    %v1102 = vunpack.c.l.b16 %v325
    %v1103 = vunpack.c.h.b16 %v325
    %v1104 = vunpack.c.l.b16 %v326
    %v1105 = vunpack.c.h.b16 %v326
    %v1106 = vunpack.c.l.b16 %v327
    %v1107 = vunpack.c.h.b16 %v327
    %v1108 = vunpack.c.l.b16 %v328
    %v1109 = vunpack.c.h.b16 %v328
    %v1110 = vunpack.c.l.b16 %v329
    %v1111 = vunpack.c.h.b16 %v329
    %v1112 = vunpack.c.l.b16 %v330
    %v1113 = vunpack.c.h.b16 %v330
    %v1114 = vunpack.c.l.b16 %v331
    %v1115 = vunpack.c.h.b16 %v331
    %v1116 = vunpack.c.l.b16 %v332
    %v1117 = vunpack.c.h.b16 %v332
    %v1118 = vunpack.c.l.b16 %v333
    %v1119 = vunpack.c.h.b16 %v333
    %v1120 = vunpack.c.l.b16 %v334
    %v1121 = vunpack.c.h.b16 %v334
    %v1122 = vunpack.c.l.b16 %v335
    %v1123 = vunpack.c.h.b16 %v335
    %v1124 = vunpack.c.l.b16 %v336
    %v1125 = vunpack.c.h.b16 %v336
    %v1126 = vunpack.c.l.b16 %v337
    %v1127 = vunpack.c.h.b16 %v337
    %v1128 = vpack.c.b16 %v620, %v616
    %v1129 = vpack.c.b16 %v621, %v617
    %v1130 = vpack.c.b16 %v622, %v618
    %v1131 = vpack.c.b16 %v623, %v619
    %v1132 = vpack.c.b16 %v628, %v624
    %v1133 = vpack.c.b16 %v629, %v625
    %v1134 = vpack.c.b16 %v630, %v626
    %v1135 = vpack.c.b16 %v631, %v627
    %v1136 = vpack.c.b16 %v636, %v632
    %v1137 = vpack.c.b16 %v637, %v633
    %v1138 = vpack.c.b16 %v638, %v634
    %v1139 = vpack.c.b16 %v639, %v635
    %v1140 = vpack.c.b16 %v644, %v640
    %v1141 = vpack.c.b16 %v645, %v641
    %v1142 = vpack.c.b16 %v646, %v642
    %v1143 = vpack.c.b16 %v647, %v643
    %v1144 = vpack.c.b16 %v652, %v648
    %v1145 = vpack.c.b16 %v653, %v649
    %v1146 = vpack.c.b16 %v654, %v650
    %v1147 = vpack.c.b16 %v655, %v651
    %v1148 = vpack.c.b16 %v660, %v656
    %v1149 = vpack.c.b16 %v661, %v657
    %v1150 = vpack.c.b16 %v662, %v658
    %v1151 = vpack.c.b16 %v663, %v659
    %v1152 = vpack.c.b16 %v668, %v664
    %v1153 = vpack.c.b16 %v669, %v665
    %v1154 = vpack.c.b16 %v670, %v666
    %v1155 = vpack.c.b16 %v671, %v667
    %v1156 = vpack.c.b16 %v676, %v672
    %v1157 = vpack.c.b16 %v677, %v673
    %v1158 = vpack.c.b16 %v678, %v674
    %v1159 = vpack.c.b16 %v679, %v675
    %v1160 = vpack.c.b16 %v684, %v680
    %v1161 = vpack.c.b16 %v685, %v681
    %v1162 = vpack.c.b16 %v686, %v682
    %v1163 = vpack.c.b16 %v687, %v683
    %v1164 = vpack.c.b16 %v692, %v688
    %v1165 = vpack.c.b16 %v693, %v689
    %v1166 = vpack.c.b16 %v694, %v690
    %v1167 = vpack.c.b16 %v695, %v691
    %v1168 = vpack.c.b16 %v700, %v696
    %v1169 = vpack.c.b16 %v701, %v697
    %v1170 = vpack.c.b16 %v702, %v698
    %v1171 = vpack.c.b16 %v703, %v699
    %v1172 = vpack.c.b16 %v708, %v704
    %v1173 = vpack.c.b16 %v709, %v705
    %v1174 = vpack.c.b16 %v710, %v706
    %v1175 = vpack.c.b16 %v711, %v707
    %v1176 = vpack.c.b16 %v716, %v712
    %v1177 = vpack.c.b16 %v717, %v713
    %v1178 = vpack.c.b16 %v718, %v714
    %v1179 = vpack.c.b16 %v719, %v715
    %v1180 = vpack.c.b16 %v724, %v720
    %v1181 = vpack.c.b16 %v725, %v721
    %v1182 = vpack.c.b16 %v726, %v722
    %v1183 = vpack.c.b16 %v727, %v723
    %v1184 = vpack.c.b16 %v732, %v728
    %v1185 = vpack.c.b16 %v733, %v729
    %v1186 = vpack.c.b16 %v734, %v730
    %v1187 = vpack.c.b16 %v735, %v731
    %v1188 = vpack.c.b16 %v740, %v736
    %v1189 = vpack.c.b16 %v741, %v737
    %v1190 = vpack.c.b16 %v742, %v738
    %v1191 = vpack.c.b16 %v743, %v739
    %v1192 = vpack.c.b16 %v748, %v744
    %v1193 = vpack.c.b16 %v749, %v745
    %v1194 = vpack.c.b16 %v750, %v746
    %v1195 = vpack.c.b16 %v751, %v747
    %v1196 = vpack.c.b16 %v756, %v752
    %v1197 = vpack.c.b16 %v757, %v753
    %v1198 = vpack.c.b16 %v758, %v754
    %v1199 = vpack.c.b16 %v759, %v755
    %v1200 = vpack.c.b16 %v764, %v760
    %v1201 = vpack.c.b16 %v765, %v761
    %v1202 = vpack.c.b16 %v766, %v762
    %v1203 = vpack.c.b16 %v767, %v763
    %v1204 = vpack.c.b16 %v772, %v768
    %v1205 = vpack.c.b16 %v773, %v769
    %v1206 = vpack.c.b16 %v774, %v770
    %v1207 = vpack.c.b16 %v775, %v771
    %v1208 = vpack.c.b16 %v780, %v776
    %v1209 = vpack.c.b16 %v781, %v777
    %v1210 = vpack.c.b16 %v782, %v778
    %v1211 = vpack.c.b16 %v783, %v779
    %v1212 = vpack.c.b16 %v788, %v784
    %v1213 = vpack.c.b16 %v789, %v785
    %v1214 = vpack.c.b16 %v790, %v786
    %v1215 = vpack.c.b16 %v791, %v787
    %v1216 = vpack.c.b16 %v796, %v792
    %v1217 = vpack.c.b16 %v797, %v793
    %v1218 = vpack.c.b16 %v798, %v794
    %v1219 = vpack.c.b16 %v799, %v795
    %v1220 = vpack.c.b16 %v804, %v800
    %v1221 = vpack.c.b16 %v805, %v801
    %v1222 = vpack.c.b16 %v806, %v802
    %v1223 = vpack.c.b16 %v807, %v803
    %v1224 = vpack.c.b16 %v812, %v808
    %v1225 = vpack.c.b16 %v813, %v809
    %v1226 = vpack.c.b16 %v814, %v810
    %v1227 = vpack.c.b16 %v815, %v811
    %v1228 = vpack.c.b16 %v820, %v816
    %v1229 = vpack.c.b16 %v821, %v817
    %v1230 = vpack.c.b16 %v822, %v818
    %v1231 = vpack.c.b16 %v823, %v819
    %v1232 = vpack.c.b16 %v828, %v824
    %v1233 = vpack.c.b16 %v829, %v825
    %v1234 = vpack.c.b16 %v830, %v826
    %v1235 = vpack.c.b16 %v831, %v827
    %v1236 = vpack.c.b16 %v836, %v832
    %v1237 = vpack.c.b16 %v837, %v833
    %v1238 = vpack.c.b16 %v838, %v834
    %v1239 = vpack.c.b16 %v839, %v835
    %v1240 = vpack.c.b16 %v844, %v840
    %v1241 = vpack.c.b16 %v845, %v841
    %v1242 = vpack.c.b16 %v846, %v842
    %v1243 = vpack.c.b16 %v847, %v843
    %v1244 = vpack.c.b16 %v852, %v848
    %v1245 = vpack.c.b16 %v853, %v849
    %v1246 = vpack.c.b16 %v854, %v850
    %v1247 = vpack.c.b16 %v855, %v851
    %v1248 = vpack.c.b16 %v860, %v856
    %v1249 = vpack.c.b16 %v861, %v857
    %v1250 = vpack.c.b16 %v862, %v858
    %v1251 = vpack.c.b16 %v863, %v859
    %v1252 = vpack.c.b16 %v868, %v864
    %v1253 = vpack.c.b16 %v869, %v865
    %v1254 = vpack.c.b16 %v870, %v866
    %v1255 = vpack.c.b16 %v871, %v867
    %v1256 = vpack.c.b16 %v876, %v872
    %v1257 = vpack.c.b16 %v877, %v873
    %v1258 = vpack.c.b16 %v878, %v874
    %v1259 = vpack.c.b16 %v879, %v875
    %v1260 = vpack.c.b16 %v884, %v880
    %v1261 = vpack.c.b16 %v885, %v881
    %v1262 = vpack.c.b16 %v886, %v882
    %v1263 = vpack.c.b16 %v887, %v883
    %v1264 = vpack.c.b16 %v892, %v888
    %v1265 = vpack.c.b16 %v893, %v889
    %v1266 = vpack.c.b16 %v894, %v890
    %v1267 = vpack.c.b16 %v895, %v891
    %v1268 = vpack.c.b16 %v900, %v896
    %v1269 = vpack.c.b16 %v901, %v897
    %v1270 = vpack.c.b16 %v902, %v898
    %v1271 = vpack.c.b16 %v903, %v899
    %v1272 = vpack.c.b16 %v908, %v904
    %v1273 = vpack.c.b16 %v909, %v905
    %v1274 = vpack.c.b16 %v910, %v906
    %v1275 = vpack.c.b16 %v911, %v907
    %v1276 = vpack.c.b16 %v916, %v912
    %v1277 = vpack.c.b16 %v917, %v913
    %v1278 = vpack.c.b16 %v918, %v914
    %v1279 = vpack.c.b16 %v919, %v915
    %v1280 = vpack.c.b16 %v924, %v920
    %v1281 = vpack.c.b16 %v925, %v921
    %v1282 = vpack.c.b16 %v926, %v922
    %v1283 = vpack.c.b16 %v927, %v923
    %v1284 = vpack.c.b16 %v932, %v928
    %v1285 = vpack.c.b16 %v933, %v929
    %v1286 = vpack.c.b16 %v934, %v930
    %v1287 = vpack.c.b16 %v935, %v931
    %v1288 = vpack.c.b16 %v940, %v936
    %v1289 = vpack.c.b16 %v941, %v937
    %v1290 = vpack.c.b16 %v942, %v938
    %v1291 = vpack.c.b16 %v943, %v939
    %v1292 = vpack.c.b16 %v948, %v944
    %v1293 = vpack.c.b16 %v949, %v945
    %v1294 = vpack.c.b16 %v950, %v946
    %v1295 = vpack.c.b16 %v951, %v947
    %v1296 = vpack.c.b16 %v956, %v952
    %v1297 = vpack.c.b16 %v957, %v953
    %v1298 = vpack.c.b16 %v958, %v954
    %v1299 = vpack.c.b16 %v959, %v955
    %v1300 = vpack.c.b16 %v964, %v960
    %v1301 = vpack.c.b16 %v965, %v961
    %v1302 = vpack.c.b16 %v966, %v962
    %v1303 = vpack.c.b16 %v967, %v963
    %v1304 = vpack.c.b16 %v972, %v968
    %v1305 = vpack.c.b16 %v973, %v969
    %v1306 = vpack.c.b16 %v974, %v970
    %v1307 = vpack.c.b16 %v975, %v971
    %v1308 = vpack.c.b16 %v980, %v976
    %v1309 = vpack.c.b16 %v981, %v977
    %v1310 = vpack.c.b16 %v982, %v978
    %v1311 = vpack.c.b16 %v983, %v979
    %v1312 = vpack.c.b16 %v988, %v984
    %v1313 = vpack.c.b16 %v989, %v985
    %v1314 = vpack.c.b16 %v990, %v986
    %v1315 = vpack.c.b16 %v991, %v987
    %v1316 = vpack.c.b16 %v996, %v992
    %v1317 = vpack.c.b16 %v997, %v993
    %v1318 = vpack.c.b16 %v998, %v994
    %v1319 = vpack.c.b16 %v999, %v995
    %v1320 = vpack.c.b16 %v1004, %v1000
    %v1321 = vpack.c.b16 %v1005, %v1001
    %v1322 = vpack.c.b16 %v1006, %v1002
    %v1323 = vpack.c.b16 %v1007, %v1003
    %v1324 = vpack.c.b16 %v1012, %v1008
    %v1325 = vpack.c.b16 %v1013, %v1009
    %v1326 = vpack.c.b16 %v1014, %v1010
    %v1327 = vpack.c.b16 %v1015, %v1011
    %v1328 = vpack.c.b16 %v1020, %v1016
    %v1329 = vpack.c.b16 %v1021, %v1017
    %v1330 = vpack.c.b16 %v1022, %v1018
    %v1331 = vpack.c.b16 %v1023, %v1019
    %v1332 = vpack.c.b16 %v1028, %v1024
    %v1333 = vpack.c.b16 %v1029, %v1025
    %v1334 = vpack.c.b16 %v1030, %v1026
    %v1335 = vpack.c.b16 %v1031, %v1027
    %v1336 = vpack.c.b16 %v1036, %v1032
    %v1337 = vpack.c.b16 %v1037, %v1033
    %v1338 = vpack.c.b16 %v1038, %v1034
    %v1339 = vpack.c.b16 %v1039, %v1035
    %v1340 = vpack.c.b16 %v1044, %v1040
    %v1341 = vpack.c.b16 %v1045, %v1041
    %v1342 = vpack.c.b16 %v1046, %v1042
    %v1343 = vpack.c.b16 %v1047, %v1043
    %v1344 = vpack.c.b16 %v1052, %v1048
    %v1345 = vpack.c.b16 %v1053, %v1049
    %v1346 = vpack.c.b16 %v1054, %v1050
    %v1347 = vpack.c.b16 %v1055, %v1051
    %v1348 = vpack.c.b16 %v1060, %v1056
    %v1349 = vpack.c.b16 %v1061, %v1057
    %v1350 = vpack.c.b16 %v1062, %v1058
    %v1351 = vpack.c.b16 %v1063, %v1059
    %v1352 = vpack.c.b16 %v1068, %v1064
    %v1353 = vpack.c.b16 %v1069, %v1065
    %v1354 = vpack.c.b16 %v1070, %v1066
    %v1355 = vpack.c.b16 %v1071, %v1067
    %v1356 = vpack.c.b16 %v1076, %v1072
    %v1357 = vpack.c.b16 %v1077, %v1073
    %v1358 = vpack.c.b16 %v1078, %v1074
    %v1359 = vpack.c.b16 %v1079, %v1075
    %v1360 = vpack.c.b16 %v1084, %v1080
    %v1361 = vpack.c.b16 %v1085, %v1081
    %v1362 = vpack.c.b16 %v1086, %v1082
    %v1363 = vpack.c.b16 %v1087, %v1083
    %v1364 = vpack.c.b16 %v1092, %v1088
    %v1365 = vpack.c.b16 %v1093, %v1089
    %v1366 = vpack.c.b16 %v1094, %v1090
    %v1367 = vpack.c.b16 %v1095, %v1091
    %v1368 = vpack.c.b16 %v1100, %v1096
    %v1369 = vpack.c.b16 %v1101, %v1097
    %v1370 = vpack.c.b16 %v1102, %v1098
    %v1371 = vpack.c.b16 %v1103, %v1099
    %v1372 = vpack.c.b16 %v1108, %v1104
    %v1373 = vpack.c.b16 %v1109, %v1105
    %v1374 = vpack.c.b16 %v1110, %v1106
    %v1375 = vpack.c.b16 %v1111, %v1107
    %v1376 = vpack.c.b16 %v1116, %v1112
    %v1377 = vpack.c.b16 %v1117, %v1113
    %v1378 = vpack.c.b16 %v1118, %v1114
    %v1379 = vpack.c.b16 %v1119, %v1115
    %v1380 = vpack.c.b16 %v1124, %v1120
    %v1381 = vpack.c.b16 %v1125, %v1121
    %v1382 = vpack.c.b16 %v1126, %v1122
    %v1383 = vpack.c.b16 %v1127, %v1123
    %1640 = vmatprep.subr.bf16.mxu0 %v1129
    %1641 = vmatpush1.bf16.msra.mxu0 %v1128
    %1642 = vmatprep.subr.bf16.mxu0 %v1133
    %1643 = vmatpush1.bf16.msra.mxu0 %v1132
    %1644 = vmatprep.subr.bf16.mxu0 %v1137
    %1645 = vmatpush1.bf16.msra.mxu0 %v1136
    %1646 = vmatprep.subr.bf16.mxu0 %v1141
    %1647 = vmatpush1.bf16.msra.mxu0 %v1140
    %1648 = vmatprep.subr.bf16.mxu0 %v1145
    %1649 = vmatpush1.bf16.msra.mxu0 %v1144
    %1650 = vmatprep.subr.bf16.mxu0 %v1149
    %1651 = vmatpush1.bf16.msra.mxu0 %v1148
    %1652 = vmatprep.subr.bf16.mxu0 %v1153
    %1653 = vmatpush1.bf16.msra.mxu0 %v1152
    %1654 = vmatprep.subr.bf16.mxu0 %v1157
    %1655 = vmatpush1.bf16.msra.mxu0 %v1156
    %1656 = vmatprep.subr.bf16.mxu0 %v1161
    %1657 = vmatpush1.bf16.msra.mxu0 %v1160
    %1658 = vmatprep.subr.bf16.mxu0 %v1165
    %1659 = vmatpush1.bf16.msra.mxu0 %v1164
    %1660 = vmatprep.subr.bf16.mxu0 %v1169
    %1661 = vmatpush1.bf16.msra.mxu0 %v1168
    %1662 = vmatprep.subr.bf16.mxu0 %v1173
    %1663 = vmatpush1.bf16.msra.mxu0 %v1172
    %1664 = vmatprep.subr.bf16.mxu0 %v1177
    %1665 = vmatpush1.bf16.msra.mxu0 %v1176
    %1666 = vmatprep.subr.bf16.mxu0 %v1181
    %1667 = vmatpush1.bf16.msra.mxu0 %v1180
    %1668 = vmatprep.subr.bf16.mxu0 %v1185
    %1669 = vmatpush1.bf16.msra.mxu0 %v1184
    %1670 = vmatprep.subr.bf16.mxu0 %v1189
    %1671 = vmatpush1.bf16.msra.mxu0 %v1188
    %1672 = vmatprep.mubr.bf16.mxu0 %v75
    %1673 = vmatmul.mubr.bf16.gmra.mrb[0].mxu0 %v74
    %v1674 = vpop.f32.mrb[0].mxu0
    %v1675 = vadd.f32 %v343, %v1674
    %v1676 = vpop.f32.mrb[0].mxu0
    %v1677 = vadd.f32 %v347, %v1676
    %v1678 = vpop.f32.mrb[0].mxu0
    %v1679 = vpop.f32.mrb[0].mxu0
    %1680 = vdwg.mxu0
    %1681 = vmatprep.subr.bf16.mxu0 %v1193
    %1682 = vmatpush1.bf16.msra.mxu0 %v1192
    %1683 = vmatprep.subr.bf16.mxu0 %v1197
    %1684 = vmatpush1.bf16.msra.mxu0 %v1196
    %1685 = vmatprep.subr.bf16.mxu0 %v1201
    %1686 = vmatpush1.bf16.msra.mxu0 %v1200
    %1687 = vmatprep.subr.bf16.mxu0 %v1205
    %1688 = vmatpush1.bf16.msra.mxu0 %v1204
    %1689 = vmatprep.subr.bf16.mxu0 %v1209
    %1690 = vmatpush1.bf16.msra.mxu0 %v1208
    %1691 = vmatprep.subr.bf16.mxu0 %v1213
    %1692 = vmatpush1.bf16.msra.mxu0 %v1212
    %1693 = vmatprep.subr.bf16.mxu0 %v1217
    %1694 = vmatpush1.bf16.msra.mxu0 %v1216
    %1695 = vmatprep.subr.bf16.mxu0 %v1221
    %1696 = vmatpush1.bf16.msra.mxu0 %v1220
    %1697 = vmatprep.subr.bf16.mxu0 %v1225
    %1698 = vmatpush1.bf16.msra.mxu0 %v1224
    %1699 = vmatprep.subr.bf16.mxu0 %v1229
    %1700 = vmatpush1.bf16.msra.mxu0 %v1228
    %1701 = vmatprep.subr.bf16.mxu0 %v1233
    %1702 = vmatpush1.bf16.msra.mxu0 %v1232
    %1703 = vmatprep.subr.bf16.mxu0 %v1237
    %1704 = vmatpush1.bf16.msra.mxu0 %v1236
    %1705 = vmatprep.subr.bf16.mxu0 %v1241
    %1706 = vmatpush1.bf16.msra.mxu0 %v1240
    %1707 = vmatprep.subr.bf16.mxu0 %v1245
    %1708 = vmatpush1.bf16.msra.mxu0 %v1244
    %1709 = vmatprep.subr.bf16.mxu0 %v1249
    %1710 = vmatpush1.bf16.msra.mxu0 %v1248
    %1711 = vmatprep.subr.bf16.mxu0 %v1253
    %1712 = vmatpush1.bf16.msra.mxu0 %v1252
    %1713 = vmatprep.mubr.bf16.mxu0 %v77
    %1714 = vmatmul.mubr.bf16.gmra.mrb[0].mxu0 %v76
    %v1715 = vpop.f32.mrb[0].mxu0
    %v1716 = vadd.f32 %v1675, %v1715
    %v1717 = vpop.f32.mrb[0].mxu0
    %v1718 = vadd.f32 %v1677, %v1717
    %v1719 = vpop.f32.mrb[0].mxu0
    %v1720 = vpop.f32.mrb[0].mxu0
    %1721 = vdwg.mxu0
    %1722 = vmatprep.subr.bf16.mxu0 %v1257
    %1723 = vmatpush1.bf16.msra.mxu0 %v1256
    %1724 = vmatprep.subr.bf16.mxu0 %v1261
    %1725 = vmatpush1.bf16.msra.mxu0 %v1260
    %1726 = vmatprep.subr.bf16.mxu0 %v1265
    %1727 = vmatpush1.bf16.msra.mxu0 %v1264
    %1728 = vmatprep.subr.bf16.mxu0 %v1269
    %1729 = vmatpush1.bf16.msra.mxu0 %v1268
    %1730 = vmatprep.subr.bf16.mxu0 %v1273
    %1731 = vmatpush1.bf16.msra.mxu0 %v1272
    %1732 = vmatprep.subr.bf16.mxu0 %v1277
    %1733 = vmatpush1.bf16.msra.mxu0 %v1276
    %1734 = vmatprep.subr.bf16.mxu0 %v1281
    %1735 = vmatpush1.bf16.msra.mxu0 %v1280
    %1736 = vmatprep.subr.bf16.mxu0 %v1285
    %1737 = vmatpush1.bf16.msra.mxu0 %v1284
    %1738 = vmatprep.subr.bf16.mxu0 %v1289
    %1739 = vmatpush1.bf16.msra.mxu0 %v1288
    %1740 = vmatprep.subr.bf16.mxu0 %v1293
    %1741 = vmatpush1.bf16.msra.mxu0 %v1292
    %1742 = vmatprep.subr.bf16.mxu0 %v1297
    %1743 = vmatpush1.bf16.msra.mxu0 %v1296
    %1744 = vmatprep.subr.bf16.mxu0 %v1301
    %1745 = vmatpush1.bf16.msra.mxu0 %v1300
    %1746 = vmatprep.subr.bf16.mxu0 %v1305
    %1747 = vmatpush1.bf16.msra.mxu0 %v1304
    %1748 = vmatprep.subr.bf16.mxu0 %v1309
    %1749 = vmatpush1.bf16.msra.mxu0 %v1308
    %1750 = vmatprep.subr.bf16.mxu0 %v1313
    %1751 = vmatpush1.bf16.msra.mxu0 %v1312
    %1752 = vmatprep.subr.bf16.mxu0 %v1317
    %1753 = vmatpush1.bf16.msra.mxu0 %v1316
    %1754 = vmatprep.mubr.bf16.mxu0 %v79
    %1755 = vmatmul.mubr.bf16.gmra.mrb[0].mxu0 %v78
    %v1756 = vpop.f32.mrb[0].mxu0
    %v1757 = vadd.f32 %v1716, %v1756
    %v1758 = vpop.f32.mrb[0].mxu0
    %v1759 = vadd.f32 %v1718, %v1758
    %v1760 = vpop.f32.mrb[0].mxu0
    %v1761 = vpop.f32.mrb[0].mxu0
    %1762 = vdwg.mxu0
    %1763 = vmatprep.subr.bf16.mxu0 %v1321
    %1764 = vmatpush1.bf16.msra.mxu0 %v1320
    %1765 = vmatprep.subr.bf16.mxu0 %v1325
    %1766 = vmatpush1.bf16.msra.mxu0 %v1324
    %1767 = vmatprep.subr.bf16.mxu0 %v1329
    %1768 = vmatpush1.bf16.msra.mxu0 %v1328
    %1769 = vmatprep.subr.bf16.mxu0 %v1333
    %1770 = vmatpush1.bf16.msra.mxu0 %v1332
    %1771 = vmatprep.subr.bf16.mxu0 %v1337
    %1772 = vmatpush1.bf16.msra.mxu0 %v1336
    %1773 = vmatprep.subr.bf16.mxu0 %v1341
    %1774 = vmatpush1.bf16.msra.mxu0 %v1340
    %1775 = vmatprep.subr.bf16.mxu0 %v1345
    %1776 = vmatpush1.bf16.msra.mxu0 %v1344
    %1777 = vmatprep.subr.bf16.mxu0 %v1349
    %1778 = vmatpush1.bf16.msra.mxu0 %v1348
    %1779 = vmatprep.subr.bf16.mxu0 %v1353
    %1780 = vmatpush1.bf16.msra.mxu0 %v1352
    %1781 = vmatprep.subr.bf16.mxu0 %v1357
    %1782 = vmatpush1.bf16.msra.mxu0 %v1356
    %1783 = vmatprep.subr.bf16.mxu0 %v1361
    %1784 = vmatpush1.bf16.msra.mxu0 %v1360
    %1785 = vmatprep.subr.bf16.mxu0 %v1365
    %1786 = vmatpush1.bf16.msra.mxu0 %v1364
    %1787 = vmatprep.subr.bf16.mxu0 %v1369
    %1788 = vmatpush1.bf16.msra.mxu0 %v1368
    %1789 = vmatprep.subr.bf16.mxu0 %v1373
    %1790 = vmatpush1.bf16.msra.mxu0 %v1372
    %1791 = vmatprep.subr.bf16.mxu0 %v1377
    %1792 = vmatpush1.bf16.msra.mxu0 %v1376
    %1793 = vmatprep.subr.bf16.mxu0 %v1381
    %1794 = vmatpush1.bf16.msra.mxu0 %v1380
    %1795 = vmatprep.mubr.bf16.mxu0 %v81
    %1796 = vmatmul.mubr.bf16.gmra.mrb[0].mxu0 %v80
    %v1797 = vpop.f32.mrb[0].mxu0
    %v1798 = vadd.f32 %v1757, %v1797
    %v1799 = vpop.f32.mrb[0].mxu0
    %v1800 = vadd.f32 %v1759, %v1799
    %v1801 = vpop.f32.mrb[0].mxu0
    %v1802 = vpop.f32.mrb[0].mxu0
    %1803 = vdwg.mxu0
    %1804 = vmatprep.subr.bf16.mxu0 %v1131
    %1805 = vmatpush1.bf16.msra.mxu0 %v1130
    %1806 = vmatprep.subr.bf16.mxu0 %v1135
    %1807 = vmatpush1.bf16.msra.mxu0 %v1134
    %1808 = vmatprep.subr.bf16.mxu0 %v1139
    %1809 = vmatpush1.bf16.msra.mxu0 %v1138
    %1810 = vmatprep.subr.bf16.mxu0 %v1143
    %1811 = vmatpush1.bf16.msra.mxu0 %v1142
    %1812 = vmatprep.subr.bf16.mxu0 %v1147
    %1813 = vmatpush1.bf16.msra.mxu0 %v1146
    %1814 = vmatprep.subr.bf16.mxu0 %v1151
    %1815 = vmatpush1.bf16.msra.mxu0 %v1150
    %1816 = vmatprep.subr.bf16.mxu0 %v1155
    %1817 = vmatpush1.bf16.msra.mxu0 %v1154
    %1818 = vmatprep.subr.bf16.mxu0 %v1159
    %1819 = vmatpush1.bf16.msra.mxu0 %v1158
    %1820 = vmatprep.subr.bf16.mxu0 %v1163
    %1821 = vmatpush1.bf16.msra.mxu0 %v1162
    %1822 = vmatprep.subr.bf16.mxu0 %v1167
    %1823 = vmatpush1.bf16.msra.mxu0 %v1166
    %1824 = vmatprep.subr.bf16.mxu0 %v1171
    %1825 = vmatpush1.bf16.msra.mxu0 %v1170
    %1826 = vmatprep.subr.bf16.mxu0 %v1175
    %1827 = vmatpush1.bf16.msra.mxu0 %v1174
    %1828 = vmatprep.subr.bf16.mxu0 %v1179
    %1829 = vmatpush1.bf16.msra.mxu0 %v1178
    %1830 = vmatprep.subr.bf16.mxu0 %v1183
    %1831 = vmatpush1.bf16.msra.mxu0 %v1182
    %1832 = vmatprep.subr.bf16.mxu0 %v1187
    %1833 = vmatpush1.bf16.msra.mxu0 %v1186
    %1834 = vmatprep.subr.bf16.mxu0 %v1191
    %1835 = vmatpush1.bf16.msra.mxu0 %v1190
    %1836 = vmatprep.mubr.bf16.mxu0 %v75
    %1837 = vmatmul.mubr.bf16.gmra.mrb[0].mxu0 %v74
    %v1838 = vpop.f32.mrb[0].mxu0
    %v1839 = vadd.f32 %v351, %v1838
    %v1840 = vpop.f32.mrb[0].mxu0
    %v1841 = vadd.f32 %v355, %v1840
    %v1842 = vpop.f32.mrb[0].mxu0
    %v1843 = vpop.f32.mrb[0].mxu0
    %1844 = vdwg.mxu0
    %1845 = vmatprep.subr.bf16.mxu0 %v1195
    %1846 = vmatpush1.bf16.msra.mxu0 %v1194
    %1847 = vmatprep.subr.bf16.mxu0 %v1199
    %1848 = vmatpush1.bf16.msra.mxu0 %v1198
    %1849 = vmatprep.subr.bf16.mxu0 %v1203
    %1850 = vmatpush1.bf16.msra.mxu0 %v1202
    %1851 = vmatprep.subr.bf16.mxu0 %v1207
    %1852 = vmatpush1.bf16.msra.mxu0 %v1206
    %1853 = vmatprep.subr.bf16.mxu0 %v1211
    %1854 = vmatpush1.bf16.msra.mxu0 %v1210
    %1855 = vmatprep.subr.bf16.mxu0 %v1215
    %1856 = vmatpush1.bf16.msra.mxu0 %v1214
    %1857 = vmatprep.subr.bf16.mxu0 %v1219
    %1858 = vmatpush1.bf16.msra.mxu0 %v1218
    %1859 = vmatprep.subr.bf16.mxu0 %v1223
    %1860 = vmatpush1.bf16.msra.mxu0 %v1222
    %1861 = vmatprep.subr.bf16.mxu0 %v1227
    %1862 = vmatpush1.bf16.msra.mxu0 %v1226
    %1863 = vmatprep.subr.bf16.mxu0 %v1231
    %1864 = vmatpush1.bf16.msra.mxu0 %v1230
    %1865 = vmatprep.subr.bf16.mxu0 %v1235
    %1866 = vmatpush1.bf16.msra.mxu0 %v1234
    %1867 = vmatprep.subr.bf16.mxu0 %v1239
    %1868 = vmatpush1.bf16.msra.mxu0 %v1238
    %1869 = vmatprep.subr.bf16.mxu0 %v1243
    %1870 = vmatpush1.bf16.msra.mxu0 %v1242
    %1871 = vmatprep.subr.bf16.mxu0 %v1247
    %1872 = vmatpush1.bf16.msra.mxu0 %v1246
    %1873 = vmatprep.subr.bf16.mxu0 %v1251
    %1874 = vmatpush1.bf16.msra.mxu0 %v1250
    %1875 = vmatprep.subr.bf16.mxu0 %v1255
    %1876 = vmatpush1.bf16.msra.mxu0 %v1254
    %1877 = vmatprep.mubr.bf16.mxu0 %v77
    %1878 = vmatmul.mubr.bf16.gmra.mrb[0].mxu0 %v76
    %v1879 = vpop.f32.mrb[0].mxu0
    %v1880 = vadd.f32 %v1839, %v1879
    %v1881 = vpop.f32.mrb[0].mxu0
    %v1882 = vadd.f32 %v1841, %v1881
    %v1883 = vpop.f32.mrb[0].mxu0
    %v1884 = vpop.f32.mrb[0].mxu0
    %1885 = vdwg.mxu0
    %1886 = vmatprep.subr.bf16.mxu0 %v1259
    %1887 = vmatpush1.bf16.msra.mxu0 %v1258
    %1888 = vmatprep.subr.bf16.mxu0 %v1263
    %1889 = vmatpush1.bf16.msra.mxu0 %v1262
    %1890 = vmatprep.subr.bf16.mxu0 %v1267
    %1891 = vmatpush1.bf16.msra.mxu0 %v1266
    %1892 = vmatprep.subr.bf16.mxu0 %v1271
    %1893 = vmatpush1.bf16.msra.mxu0 %v1270
    %1894 = vmatprep.subr.bf16.mxu0 %v1275
    %1895 = vmatpush1.bf16.msra.mxu0 %v1274
    %1896 = vmatprep.subr.bf16.mxu0 %v1279
    %1897 = vmatpush1.bf16.msra.mxu0 %v1278
    %1898 = vmatprep.subr.bf16.mxu0 %v1283
    %1899 = vmatpush1.bf16.msra.mxu0 %v1282
    %1900 = vmatprep.subr.bf16.mxu0 %v1287
    %1901 = vmatpush1.bf16.msra.mxu0 %v1286
    %1902 = vmatprep.subr.bf16.mxu0 %v1291
    %1903 = vmatpush1.bf16.msra.mxu0 %v1290
    %1904 = vmatprep.subr.bf16.mxu0 %v1295
    %1905 = vmatpush1.bf16.msra.mxu0 %v1294
    %1906 = vmatprep.subr.bf16.mxu0 %v1299
    %1907 = vmatpush1.bf16.msra.mxu0 %v1298
    %1908 = vmatprep.subr.bf16.mxu0 %v1303
    %1909 = vmatpush1.bf16.msra.mxu0 %v1302
    %1910 = vmatprep.subr.bf16.mxu0 %v1307
    %1911 = vmatpush1.bf16.msra.mxu0 %v1306
    %1912 = vmatprep.subr.bf16.mxu0 %v1311
    %1913 = vmatpush1.bf16.msra.mxu0 %v1310
    %1914 = vmatprep.subr.bf16.mxu0 %v1315
    %1915 = vmatpush1.bf16.msra.mxu0 %v1314
    %1916 = vmatprep.subr.bf16.mxu0 %v1319
    %1917 = vmatpush1.bf16.msra.mxu0 %v1318
    %1918 = vmatprep.mubr.bf16.mxu0 %v79
    %1919 = vmatmul.mubr.bf16.gmra.mrb[0].mxu0 %v78
    %v1920 = vpop.f32.mrb[0].mxu0
    %v1921 = vadd.f32 %v1880, %v1920
    %v1922 = vpop.f32.mrb[0].mxu0
    %v1923 = vadd.f32 %v1882, %v1922
    %v1924 = vpop.f32.mrb[0].mxu0
    %v1925 = vpop.f32.mrb[0].mxu0
    %1926 = vdwg.mxu0
    %1927 = vmatprep.subr.bf16.mxu0 %v1323
    %1928 = vmatpush1.bf16.msra.mxu0 %v1322
    %1929 = vmatprep.subr.bf16.mxu0 %v1327
    %1930 = vmatpush1.bf16.msra.mxu0 %v1326
    %1931 = vmatprep.subr.bf16.mxu0 %v1331
    %1932 = vmatpush1.bf16.msra.mxu0 %v1330
    %1933 = vmatprep.subr.bf16.mxu0 %v1335
    %1934 = vmatpush1.bf16.msra.mxu0 %v1334
    %1935 = vmatprep.subr.bf16.mxu0 %v1339
    %1936 = vmatpush1.bf16.msra.mxu0 %v1338
    %1937 = vmatprep.subr.bf16.mxu0 %v1343
    %1938 = vmatpush1.bf16.msra.mxu0 %v1342
    %1939 = vmatprep.subr.bf16.mxu0 %v1347
    %1940 = vmatpush1.bf16.msra.mxu0 %v1346
    %1941 = vmatprep.subr.bf16.mxu0 %v1351
    %1942 = vmatpush1.bf16.msra.mxu0 %v1350
    %1943 = vmatprep.subr.bf16.mxu0 %v1355
    %1944 = vmatpush1.bf16.msra.mxu0 %v1354
    %1945 = vmatprep.subr.bf16.mxu0 %v1359
    %1946 = vmatpush1.bf16.msra.mxu0 %v1358
    %1947 = vmatprep.subr.bf16.mxu0 %v1363
    %1948 = vmatpush1.bf16.msra.mxu0 %v1362
    %1949 = vmatprep.subr.bf16.mxu0 %v1367
    %1950 = vmatpush1.bf16.msra.mxu0 %v1366
    %1951 = vmatprep.subr.bf16.mxu0 %v1371
    %1952 = vmatpush1.bf16.msra.mxu0 %v1370
    %1953 = vmatprep.subr.bf16.mxu0 %v1375
    %1954 = vmatpush1.bf16.msra.mxu0 %v1374
    %1955 = vmatprep.subr.bf16.mxu0 %v1379
    %1956 = vmatpush1.bf16.msra.mxu0 %v1378
    %1957 = vmatprep.subr.bf16.mxu0 %v1383
    %1958 = vmatpush1.bf16.msra.mxu0 %v1382
    %1959 = vmatprep.mubr.bf16.mxu0 %v81
    %1960 = vmatmul.mubr.bf16.gmra.mrb[0].mxu0 %v80
    %v1961 = vpop.f32.mrb[0].mxu0
    %v1962 = vadd.f32 %v1921, %v1961
    %v1963 = vpop.f32.mrb[0].mxu0
    %v1964 = vadd.f32 %v1923, %v1963
    %v1965 = vpop.f32.mrb[0].mxu0
    %v1966 = vpop.f32.mrb[0].mxu0
    %1967 = vdwg.mxu0
    %v1968 = vmul.f32 %v1798, 0.2
    %v1969 = vmul.f32 %v1800, 0.2
    %v1970 = vmul.f32 %v1962, 0.2
    %v1971 = vmul.f32 %v1964, 0.2
    %v1972 = vmax.f32 %v1798, %v1968
    %v1973 = vmax.f32 %v1800, %v1969
    %v1974 = vmax.f32 %v1962, %v1970
    %v1975 = vmax.f32 %v1964, %v1971
    %v1976 = vpack.c.bf16 %v1972, %v1972
    %v1977 = vpack.c.bf16 %v1973, %v1973
    %v1978 = vpack.c.bf16 %v1974, %v1974
    %v1979 = vpack.c.bf16 %v1975, %v1975
    %v1980 = vld [vmem:[#allocation7] sm:$0xff]
    %v1981 = vld [vmem:[#allocation7 + $0x8] sm:$0xff]
    %v1982 = vld [vmem:[#allocation7 + $0x10] sm:$0xff]
    %v1983 = vld [vmem:[#allocation7 + $0x18] sm:$0xff]
    %v1984 = vld [vmem:[#allocation7 + $0x20] sm:$0xff]
    %v1985 = vld [vmem:[#allocation7 + $0x28] sm:$0xff]
    %v1986 = vld [vmem:[#allocation7 + $0x30] sm:$0xff]
    %v1987 = vld [vmem:[#allocation7 + $0x38] sm:$0xff]
    %v1988 = vld [vmem:[#allocation7 + $0x40] sm:$0xff]
    %v1989 = vld [vmem:[#allocation7 + $0x48] sm:$0xff]
    %v1990 = vld [vmem:[#allocation7 + $0x50] sm:$0xff]
    %v1991 = vld [vmem:[#allocation7 + $0x58] sm:$0xff]
    %v1992 = vld [vmem:[#allocation7 + $0x60] sm:$0xff]
    %v1993 = vld [vmem:[#allocation7 + $0x68] sm:$0xff]
    %v1994 = vld [vmem:[#allocation7 + $0x70] sm:$0xff]
    %v1995 = vld [vmem:[#allocation7 + $0x78] sm:$0xff]
    %v1996 = vld [vmem:[#allocation7 + $0x80] sm:$0xff]
    %v1997 = vld [vmem:[#allocation7 + $0x88] sm:$0xff]
    %v1998 = vld [vmem:[#allocation7 + $0x90] sm:$0xff]
    %v1999 = vld [vmem:[#allocation7 + $0x98] sm:$0xff]
    %v2000 = vld [vmem:[#allocation7 + $0xa0] sm:$0xff]
    %v2001 = vld [vmem:[#allocation7 + $0xa8] sm:$0xff]
    %v2002 = vld [vmem:[#allocation7 + $0xb0] sm:$0xff]
    %v2003 = vld [vmem:[#allocation7 + $0xb8] sm:$0xff]
    %v2004 = vld [vmem:[#allocation7 + $0xc0] sm:$0xff]
    %v2005 = vld [vmem:[#allocation7 + $0xc8] sm:$0xff]
    %v2006 = vld [vmem:[#allocation7 + $0xd0] sm:$0xff]
    %v2007 = vld [vmem:[#allocation7 + $0xd8] sm:$0xff]
    %v2008 = vld [vmem:[#allocation7 + $0xe0] sm:$0xff]
    %v2009 = vld [vmem:[#allocation7 + $0xe8] sm:$0xff]
    %v2010 = vld [vmem:[#allocation7 + $0xf0] sm:$0xff]
    %v2011 = vld [vmem:[#allocation7 + $0xf8] sm:$0xff]
    %v2012 = vld [vmem:[#allocation7 + $0x100] sm:$0xff]
    %v2013 = vld [vmem:[#allocation7 + $0x108] sm:$0xff]
    %v2014 = vld [vmem:[#allocation7 + $0x110] sm:$0xff]
    %v2015 = vld [vmem:[#allocation7 + $0x118] sm:$0xff]
    %v2016 = vld [vmem:[#allocation7 + $0x120] sm:$0xff]
    %v2017 = vld [vmem:[#allocation7 + $0x128] sm:$0xff]
    %v2018 = vld [vmem:[#allocation7 + $0x130] sm:$0xff]
    %v2019 = vld [vmem:[#allocation7 + $0x138] sm:$0xff]
    %v2020 = vld [vmem:[#allocation7 + $0x140] sm:$0xff]
    %v2021 = vld [vmem:[#allocation7 + $0x148] sm:$0xff]
    %v2022 = vld [vmem:[#allocation7 + $0x150] sm:$0xff]
    %v2023 = vld [vmem:[#allocation7 + $0x158] sm:$0xff]
    %v2024 = vld [vmem:[#allocation7 + $0x160] sm:$0xff]
    %v2025 = vld [vmem:[#allocation7 + $0x168] sm:$0xff]
    %v2026 = vld [vmem:[#allocation7 + $0x170] sm:$0xff]
    %v2027 = vld [vmem:[#allocation7 + $0x178] sm:$0xff]
    %v2028 = vld [vmem:[#allocation7 + $0x180] sm:$0xff]
    %v2029 = vld [vmem:[#allocation7 + $0x188] sm:$0xff]
    %v2030 = vld [vmem:[#allocation7 + $0x190] sm:$0xff]
    %v2031 = vld [vmem:[#allocation7 + $0x198] sm:$0xff]
    %v2032 = vld [vmem:[#allocation7 + $0x1a0] sm:$0xff]
    %v2033 = vld [vmem:[#allocation7 + $0x1a8] sm:$0xff]
    %v2034 = vld [vmem:[#allocation7 + $0x1b0] sm:$0xff]
    %v2035 = vld [vmem:[#allocation7 + $0x1b8] sm:$0xff]
    %v2036 = vld [vmem:[#allocation7 + $0x1c0] sm:$0xff]
    %v2037 = vld [vmem:[#allocation7 + $0x1c8] sm:$0xff]
    %v2038 = vld [vmem:[#allocation7 + $0x1d0] sm:$0xff]
    %v2039 = vld [vmem:[#allocation7 + $0x1d8] sm:$0xff]
    %v2040 = vld [vmem:[#allocation7 + $0x1e0] sm:$0xff]
    %v2041 = vld [vmem:[#allocation7 + $0x1e8] sm:$0xff]
    %v2042 = vld [vmem:[#allocation7 + $0x1f0] sm:$0xff]
    %v2043 = vld [vmem:[#allocation7 + $0x1f8] sm:$0xff]
    %v2044 = vld [vmem:[%s4] sm:$0x3]
    %v2046 = vlaneseq
    %v2047 = vshrl.u32 %v2046, 7
    %v2048 = vsub.s32 0, %v2047
    %v2049 = vrot.slane %v2044, %v2048
    %v2050 = vlaneseq
    %v2051 = vshrl.u32 %v2050, 7
    %v2052 = vsub.s32 1, %v2051
    %v2053 = vrot.slane %v2044, %v2052
    %v2120 = vunpack.c.l.b16 %v1980
    %v2121 = vunpack.c.h.b16 %v1980
    %v2122 = vunpack.c.l.b16 %v1981
    %v2123 = vunpack.c.h.b16 %v1981
    %v2124 = vunpack.c.l.b16 %v1982
    %v2125 = vunpack.c.h.b16 %v1982
    %v2126 = vunpack.c.l.b16 %v1983
    %v2127 = vunpack.c.h.b16 %v1983
    %v2128 = vunpack.c.l.b16 %v1984
    %v2129 = vunpack.c.h.b16 %v1984
    %v2130 = vunpack.c.l.b16 %v1985
    %v2131 = vunpack.c.h.b16 %v1985
    %v2132 = vunpack.c.l.b16 %v1986
    %v2133 = vunpack.c.h.b16 %v1986
    %v2134 = vunpack.c.l.b16 %v1987
    %v2135 = vunpack.c.h.b16 %v1987
    %v2136 = vunpack.c.l.b16 %v1988
    %v2137 = vunpack.c.h.b16 %v1988
    %v2138 = vunpack.c.l.b16 %v1989
    %v2139 = vunpack.c.h.b16 %v1989
    %v2140 = vunpack.c.l.b16 %v1990
    %v2141 = vunpack.c.h.b16 %v1990
    %v2142 = vunpack.c.l.b16 %v1991
    %v2143 = vunpack.c.h.b16 %v1991
    %v2144 = vunpack.c.l.b16 %v1992
    %v2145 = vunpack.c.h.b16 %v1992
    %v2146 = vunpack.c.l.b16 %v1993
    %v2147 = vunpack.c.h.b16 %v1993
    %v2148 = vunpack.c.l.b16 %v1994
    %v2149 = vunpack.c.h.b16 %v1994
    %v2150 = vunpack.c.l.b16 %v1995
    %v2151 = vunpack.c.h.b16 %v1995
    %v2152 = vunpack.c.l.b16 %v1996
    %v2153 = vunpack.c.h.b16 %v1996
    %v2154 = vunpack.c.l.b16 %v1997
    %v2155 = vunpack.c.h.b16 %v1997
    %v2156 = vunpack.c.l.b16 %v1998
    %v2157 = vunpack.c.h.b16 %v1998
    %v2158 = vunpack.c.l.b16 %v1999
    %v2159 = vunpack.c.h.b16 %v1999
    %v2160 = vunpack.c.l.b16 %v2000
    %v2161 = vunpack.c.h.b16 %v2000
    %v2162 = vunpack.c.l.b16 %v2001
    %v2163 = vunpack.c.h.b16 %v2001
    %v2164 = vunpack.c.l.b16 %v2002
    %v2165 = vunpack.c.h.b16 %v2002
    %v2166 = vunpack.c.l.b16 %v2003
    %v2167 = vunpack.c.h.b16 %v2003
    %v2168 = vunpack.c.l.b16 %v2004
    %v2169 = vunpack.c.h.b16 %v2004
    %v2170 = vunpack.c.l.b16 %v2005
    %v2171 = vunpack.c.h.b16 %v2005
    %v2172 = vunpack.c.l.b16 %v2006
    %v2173 = vunpack.c.h.b16 %v2006
    %v2174 = vunpack.c.l.b16 %v2007
    %v2175 = vunpack.c.h.b16 %v2007
    %v2176 = vunpack.c.l.b16 %v2008
    %v2177 = vunpack.c.h.b16 %v2008
    %v2178 = vunpack.c.l.b16 %v2009
    %v2179 = vunpack.c.h.b16 %v2009
    %v2180 = vunpack.c.l.b16 %v2010
    %v2181 = vunpack.c.h.b16 %v2010
    %v2182 = vunpack.c.l.b16 %v2011
    %v2183 = vunpack.c.h.b16 %v2011
    %v2184 = vunpack.c.l.b16 %v2012
    %v2185 = vunpack.c.h.b16 %v2012
    %v2186 = vunpack.c.l.b16 %v2013
    %v2187 = vunpack.c.h.b16 %v2013
    %v2188 = vunpack.c.l.b16 %v2014
    %v2189 = vunpack.c.h.b16 %v2014
    %v2190 = vunpack.c.l.b16 %v2015
    %v2191 = vunpack.c.h.b16 %v2015
    %v2192 = vunpack.c.l.b16 %v2016
    %v2193 = vunpack.c.h.b16 %v2016
    %v2194 = vunpack.c.l.b16 %v2017
    %v2195 = vunpack.c.h.b16 %v2017
    %v2196 = vunpack.c.l.b16 %v2018
    %v2197 = vunpack.c.h.b16 %v2018
    %v2198 = vunpack.c.l.b16 %v2019
    %v2199 = vunpack.c.h.b16 %v2019
    %v2200 = vunpack.c.l.b16 %v2020
    %v2201 = vunpack.c.h.b16 %v2020
    %v2202 = vunpack.c.l.b16 %v2021
    %v2203 = vunpack.c.h.b16 %v2021
    %v2204 = vunpack.c.l.b16 %v2022
    %v2205 = vunpack.c.h.b16 %v2022
    %v2206 = vunpack.c.l.b16 %v2023
    %v2207 = vunpack.c.h.b16 %v2023
    %v2208 = vunpack.c.l.b16 %v2024
    %v2209 = vunpack.c.h.b16 %v2024
    %v2210 = vunpack.c.l.b16 %v2025
    %v2211 = vunpack.c.h.b16 %v2025
    %v2212 = vunpack.c.l.b16 %v2026
    %v2213 = vunpack.c.h.b16 %v2026
    %v2214 = vunpack.c.l.b16 %v2027
    %v2215 = vunpack.c.h.b16 %v2027
    %v2216 = vunpack.c.l.b16 %v2028
    %v2217 = vunpack.c.h.b16 %v2028
    %v2218 = vunpack.c.l.b16 %v2029
    %v2219 = vunpack.c.h.b16 %v2029
    %v2220 = vunpack.c.l.b16 %v2030
    %v2221 = vunpack.c.h.b16 %v2030
    %v2222 = vunpack.c.l.b16 %v2031
    %v2223 = vunpack.c.h.b16 %v2031
    %v2224 = vunpack.c.l.b16 %v2032
    %v2225 = vunpack.c.h.b16 %v2032
    %v2226 = vunpack.c.l.b16 %v2033
    %v2227 = vunpack.c.h.b16 %v2033
    %v2228 = vunpack.c.l.b16 %v2034
    %v2229 = vunpack.c.h.b16 %v2034
    %v2230 = vunpack.c.l.b16 %v2035
    %v2231 = vunpack.c.h.b16 %v2035
    %v2232 = vunpack.c.l.b16 %v2036
    %v2233 = vunpack.c.h.b16 %v2036
    %v2234 = vunpack.c.l.b16 %v2037
    %v2235 = vunpack.c.h.b16 %v2037
    %v2236 = vunpack.c.l.b16 %v2038
    %v2237 = vunpack.c.h.b16 %v2038
    %v2238 = vunpack.c.l.b16 %v2039
    %v2239 = vunpack.c.h.b16 %v2039
    %v2240 = vunpack.c.l.b16 %v2040
    %v2241 = vunpack.c.h.b16 %v2040
    %v2242 = vunpack.c.l.b16 %v2041
    %v2243 = vunpack.c.h.b16 %v2041
    %v2244 = vunpack.c.l.b16 %v2042
    %v2245 = vunpack.c.h.b16 %v2042
    %v2246 = vunpack.c.l.b16 %v2043
    %v2247 = vunpack.c.h.b16 %v2043
    %v2248 = vpack.c.b16 %v2122, %v2120
    %v2249 = vpack.c.b16 %v2123, %v2121
    %v2250 = vpack.c.b16 %v2126, %v2124
    %v2251 = vpack.c.b16 %v2127, %v2125
    %v2252 = vpack.c.b16 %v2130, %v2128
    %v2253 = vpack.c.b16 %v2131, %v2129
    %v2254 = vpack.c.b16 %v2134, %v2132
    %v2255 = vpack.c.b16 %v2135, %v2133
    %v2256 = vpack.c.b16 %v2138, %v2136
    %v2257 = vpack.c.b16 %v2139, %v2137
    %v2258 = vpack.c.b16 %v2142, %v2140
    %v2259 = vpack.c.b16 %v2143, %v2141
    %v2260 = vpack.c.b16 %v2146, %v2144
    %v2261 = vpack.c.b16 %v2147, %v2145
    %v2262 = vpack.c.b16 %v2150, %v2148
    %v2263 = vpack.c.b16 %v2151, %v2149
    %v2264 = vpack.c.b16 %v2154, %v2152
    %v2265 = vpack.c.b16 %v2155, %v2153
    %v2266 = vpack.c.b16 %v2158, %v2156
    %v2267 = vpack.c.b16 %v2159, %v2157
    %v2268 = vpack.c.b16 %v2162, %v2160
    %v2269 = vpack.c.b16 %v2163, %v2161
    %v2270 = vpack.c.b16 %v2166, %v2164
    %v2271 = vpack.c.b16 %v2167, %v2165
    %v2272 = vpack.c.b16 %v2170, %v2168
    %v2273 = vpack.c.b16 %v2171, %v2169
    %v2274 = vpack.c.b16 %v2174, %v2172
    %v2275 = vpack.c.b16 %v2175, %v2173
    %v2276 = vpack.c.b16 %v2178, %v2176
    %v2277 = vpack.c.b16 %v2179, %v2177
    %v2278 = vpack.c.b16 %v2182, %v2180
    %v2279 = vpack.c.b16 %v2183, %v2181
    %v2280 = vpack.c.b16 %v2186, %v2184
    %v2281 = vpack.c.b16 %v2187, %v2185
    %v2282 = vpack.c.b16 %v2190, %v2188
    %v2283 = vpack.c.b16 %v2191, %v2189
    %v2284 = vpack.c.b16 %v2194, %v2192
    %v2285 = vpack.c.b16 %v2195, %v2193
    %v2286 = vpack.c.b16 %v2198, %v2196
    %v2287 = vpack.c.b16 %v2199, %v2197
    %v2288 = vpack.c.b16 %v2202, %v2200
    %v2289 = vpack.c.b16 %v2203, %v2201
    %v2290 = vpack.c.b16 %v2206, %v2204
    %v2291 = vpack.c.b16 %v2207, %v2205
    %v2292 = vpack.c.b16 %v2210, %v2208
    %v2293 = vpack.c.b16 %v2211, %v2209
    %v2294 = vpack.c.b16 %v2214, %v2212
    %v2295 = vpack.c.b16 %v2215, %v2213
    %v2296 = vpack.c.b16 %v2218, %v2216
    %v2297 = vpack.c.b16 %v2219, %v2217
    %v2298 = vpack.c.b16 %v2222, %v2220
    %v2299 = vpack.c.b16 %v2223, %v2221
    %v2300 = vpack.c.b16 %v2226, %v2224
    %v2301 = vpack.c.b16 %v2227, %v2225
    %v2302 = vpack.c.b16 %v2230, %v2228
    %v2303 = vpack.c.b16 %v2231, %v2229
    %v2304 = vpack.c.b16 %v2234, %v2232
    %v2305 = vpack.c.b16 %v2235, %v2233
    %v2306 = vpack.c.b16 %v2238, %v2236
    %v2307 = vpack.c.b16 %v2239, %v2237
    %v2308 = vpack.c.b16 %v2242, %v2240
    %v2309 = vpack.c.b16 %v2243, %v2241
    %v2310 = vpack.c.b16 %v2246, %v2244
    %v2311 = vpack.c.b16 %v2247, %v2245
    %2376 = vmatprep.subr.bf16.mxu0 %v2249
    %2377 = vmatpush1.bf16.msra.mxu0 %v2248
    %2378 = vmatprep.subr.bf16.mxu0 %v2251
    %2379 = vmatpush1.bf16.msra.mxu0 %v2250
    %2380 = vmatprep.subr.bf16.mxu0 %v2253
    %2381 = vmatpush1.bf16.msra.mxu0 %v2252
    %2382 = vmatprep.subr.bf16.mxu0 %v2255
    %2383 = vmatpush1.bf16.msra.mxu0 %v2254
    %2384 = vmatprep.subr.bf16.mxu0 %v2257
    %2385 = vmatpush1.bf16.msra.mxu0 %v2256
    %2386 = vmatprep.subr.bf16.mxu0 %v2259
    %2387 = vmatpush1.bf16.msra.mxu0 %v2258
    %2388 = vmatprep.subr.bf16.mxu0 %v2261
    %2389 = vmatpush1.bf16.msra.mxu0 %v2260
    %2390 = vmatprep.subr.bf16.mxu0 %v2263
    %2391 = vmatpush1.bf16.msra.mxu0 %v2262
    %2392 = vmatprep.subr.bf16.mxu0 %v2265
    %2393 = vmatpush1.bf16.msra.mxu0 %v2264
    %2394 = vmatprep.subr.bf16.mxu0 %v2267
    %2395 = vmatpush1.bf16.msra.mxu0 %v2266
    %2396 = vmatprep.subr.bf16.mxu0 %v2269
    %2397 = vmatpush1.bf16.msra.mxu0 %v2268
    %2398 = vmatprep.subr.bf16.mxu0 %v2271
    %2399 = vmatpush1.bf16.msra.mxu0 %v2270
    %2400 = vmatprep.subr.bf16.mxu0 %v2273
    %2401 = vmatpush1.bf16.msra.mxu0 %v2272
    %2402 = vmatprep.subr.bf16.mxu0 %v2275
    %2403 = vmatpush1.bf16.msra.mxu0 %v2274
    %2404 = vmatprep.subr.bf16.mxu0 %v2277
    %2405 = vmatpush1.bf16.msra.mxu0 %v2276
    %2406 = vmatprep.subr.bf16.mxu0 %v2279
    %2407 = vmatpush1.bf16.msra.mxu0 %v2278
    %2408 = vmatprep.mubr.bf16.mxu0 %v1977
    %2409 = vmatmul.mubr.bf16.gmra.mrb[0].mxu0 %v1976
    %v2410 = vpop.f32.mrb[0].mxu0
    %v2411 = vadd.f32 %v2049, %v2410
    %v2412 = vpop.f32.mrb[0].mxu0
    %v2413 = vadd.f32 %v2053, %v2412
    %v2414 = vpop.f32.mrb[0].mxu0
    %v2415 = vpop.f32.mrb[0].mxu0
    %2416 = vdwg.mxu0
    %2417 = vmatprep.subr.bf16.mxu0 %v2281
    %2418 = vmatpush1.bf16.msra.mxu0 %v2280
    %2419 = vmatprep.subr.bf16.mxu0 %v2283
    %2420 = vmatpush1.bf16.msra.mxu0 %v2282
    %2421 = vmatprep.subr.bf16.mxu0 %v2285
    %2422 = vmatpush1.bf16.msra.mxu0 %v2284
    %2423 = vmatprep.subr.bf16.mxu0 %v2287
    %2424 = vmatpush1.bf16.msra.mxu0 %v2286
    %2425 = vmatprep.subr.bf16.mxu0 %v2289
    %2426 = vmatpush1.bf16.msra.mxu0 %v2288
    %2427 = vmatprep.subr.bf16.mxu0 %v2291
    %2428 = vmatpush1.bf16.msra.mxu0 %v2290
    %2429 = vmatprep.subr.bf16.mxu0 %v2293
    %2430 = vmatpush1.bf16.msra.mxu0 %v2292
    %2431 = vmatprep.subr.bf16.mxu0 %v2295
    %2432 = vmatpush1.bf16.msra.mxu0 %v2294
    %2433 = vmatprep.subr.bf16.mxu0 %v2297
    %2434 = vmatpush1.bf16.msra.mxu0 %v2296
    %2435 = vmatprep.subr.bf16.mxu0 %v2299
    %2436 = vmatpush1.bf16.msra.mxu0 %v2298
    %2437 = vmatprep.subr.bf16.mxu0 %v2301
    %2438 = vmatpush1.bf16.msra.mxu0 %v2300
    %2439 = vmatprep.subr.bf16.mxu0 %v2303
    %2440 = vmatpush1.bf16.msra.mxu0 %v2302
    %2441 = vmatprep.subr.bf16.mxu0 %v2305
    %2442 = vmatpush1.bf16.msra.mxu0 %v2304
    %2443 = vmatprep.subr.bf16.mxu0 %v2307
    %2444 = vmatpush1.bf16.msra.mxu0 %v2306
    %2445 = vmatprep.subr.bf16.mxu0 %v2309
    %2446 = vmatpush1.bf16.msra.mxu0 %v2308
    %2447 = vmatprep.subr.bf16.mxu0 %v2311
    %2448 = vmatpush1.bf16.msra.mxu0 %v2310
    %2449 = vmatprep.mubr.bf16.mxu0 %v1979
    %2450 = vmatmul.mubr.bf16.gmra.mrb[0].mxu0 %v1978
    %v2451 = vpop.f32.mrb[0].mxu0
    %v2452 = vadd.f32 %v2411, %v2451
    %v2453 = vpop.f32.mrb[0].mxu0
    %v2454 = vadd.f32 %v2413, %v2453
    %v2455 = vpop.f32.mrb[0].mxu0
    %v2456 = vpop.f32.mrb[0].mxu0
    %2457 = vdwg.mxu0
    %v2458 = vmul.f32 %v2452, 0.2
    %v2459 = vmul.f32 %v2454, 0.2
    %v2460 = vmax.f32 %v2452, %v2458
    %v2461 = vmax.f32 %v2454, %v2459
    %v2462 = vld [vmem:[%s5] sm:$0x3]
    %v2464 = vlaneseq
    %v2465 = vshrl.u32 %v2464, 7
    %v2466 = vsub.s32 0, %v2465
    %v2467 = vrot.slane %v2462, %v2466
    %v2468 = vlaneseq
    %v2469 = vshrl.u32 %v2468, 7
    %v2470 = vsub.s32 1, %v2469
    %v2471 = vrot.slane %v2462, %v2470
    %v2474 = vmul.f32 %v2460, %v2467
    %v2475 = vmul.f32 %v2461, %v2471
    %v2476 = vadd.f32 %v2474, %v2475
    %2477 = vadd.xlane.f32.xlu0 %v2476
    %v2478 = vpop.xlane.xlu0 %2477
    %s2479 = sld [smem:[#allocation2]]
    %v2480 = vstv %s2479
    %v2481 = vadd.f32 %v2478, %v2480
    %vm2482 = vcmask 7168
    %2483 = vst.msk [vmem:[%s7] sm:$0xff] %vm2482, %v2481
    // Predicated region
    $region42: #{tpu_custom_call.1} parent=1 // pred_check
      _
    $region43: #{tpu_custom_call.1} parent=1 // pred_check_branch
      %2485 = sbr.rel (0) target = $region45
    $region44: #{tpu_custom_call.1} parent=1 // pred_region
      _
    $region45: #{tpu_custom_call.1} parent=1 // pred_fallthru
      _
    // Predicated region
    $region46: #{tpu_custom_call.1} parent=1 // pred_check
      _
    $region47: #{tpu_custom_call.1} parent=1 // pred_check_branch
      %2487 = sbr.rel (0) target = $region49
    $region48: #{tpu_custom_call.1} parent=1 // pred_region
      _
    $region49: #{tpu_custom_call.1} parent=1 // pred_fallthru
      _
    %2488 = vsyncpa [#allocation4], 1
    %2489 = vsyncpa [#allocation6], 1

</llo_original>
